<compile_context>
chip_gen: v6e
topology: v6e:2x2x1
jax: 0.10.0
libtpu: 0.0.40
codegen_flags: <defaults>
</compile_context>

<pallas_src>
import functools

import jax
import jax.numpy as jnp
from jax.experimental import pallas as pl
from jax.experimental.pallas import tpu as pltpu

BN_EPS = 1e-5


def _round_up(n, m):
    return (n + m - 1) // m * m


def _vmem_capacity_bytes(default=64 * 1024 * 1024):
    """Physical VMEM per TensorCore; conservative v7x default if the query is unavailable."""
    try:
        return int(pltpu.get_tpu_info().vmem_capacity_bytes)
    except Exception:
        return default


# ---------------------------------------------------------------------------
# Fused kernel: streaming stats pool (Welford merge) + BN-folded Linear + ReLU + final Linear
# ---------------------------------------------------------------------------
def _fused_decoder_kernel(x_ref, w1m_ref, w1s_ref, b1_ref, wft_ref, bf_ref,
                          logits_ref, emb_ref, mean_acc, m2_acc,
                          *, t_blk, tail_len, inv_tm1):
    t = pl.program_id(1)
    n_t = pl.num_programs(1)

    @pl.when(t == 0)
    def _init():
        mean_acc[...] = jnp.zeros_like(mean_acc)
        m2_acc[...] = jnp.zeros_like(m2_acc)

    # Stream the block in its native dtype (bf16 OK); upcast once in VMEM, accumulate in f32.
    x = x_ref[...].astype(jnp.float32)          # (1, C, t_blk)

    def merge(xv, n_b):
        # Per-block partial reduce (one XLU pass per block) ...
        s = jnp.sum(xv, axis=-1)                # (1, C)
        s2 = jnp.sum(xv * xv, axis=-1)          # (1, C)
        # ... merged into global (mean, M2) with Chan's parallel-Welford update.
        n_a = (t * t_blk).astype(jnp.float32)   # samples already merged (mask only hits last blk)
        n_ab = n_a + n_b
        mean_b = s * (1.0 / n_b)
        m2_b = s2 - s * mean_b
        delta = mean_b - mean_acc[...]
        mean_acc[...] += delta * (n_b / n_ab)
        m2_acc[...] += m2_b + delta * delta * (n_a * n_b / n_ab)

    if tail_len == t_blk:
        # T is covered exactly by the blocks: no masking code generated at all.
        merge(x, float(t_blk))
    else:
        @pl.when(t < n_t - 1)
        def _body():
            merge(x, float(t_blk))

        @pl.when(t == n_t - 1)
        def _tail():
            lane = jax.lax.broadcasted_iota(jnp.int32, x.shape, dimension=2)
            merge(jnp.where(lane < tail_len, x, 0.0), float(tail_len))

    @pl.when(t == n_t - 1)
    def _finalize():
        mean = mean_acc[...]                              # (1, C)
        var = m2_acc[...] * inv_tm1                       # unbiased (torch .std default)
        std = jnp.sqrt(jnp.maximum(var, 0.0))

        # emb = BN(Linear([mean | std])) with BN folded into the weights; the concat is avoided
        # by splitting W1 into its mean/std halves (keeps everything lane-dense).
        emb = (jnp.dot(mean, w1m_ref[...], preferred_element_type=jnp.float32)
               + jnp.dot(std, w1s_ref[...], preferred_element_type=jnp.float32)
               + b1_ref[...])                             # (1, EMB_PAD)
        emb_ref[...] = emb[None]                          # (1, 1, EMB_PAD)

        act = jnp.maximum(emb, 0.0)
        logits_ref[...] = (jnp.dot(act, wft_ref[...], preferred_element_type=jnp.float32)
                           + bf_ref[...])[None]           # (1, 1, NC_PAD)


# ---------------------------------------------------------------------------
# Parameter preparation (call once at load time, not per forward)
# ---------------------------------------------------------------------------
def prepare_params(params, eps=BN_EPS):
    """Fold inference-mode BatchNorm into the emb Linear, pre-transpose, and lane-pad to 128."""
    w1 = jnp.asarray(params["w1"], jnp.float32)                      # (EMB, 2C)
    gamma = jnp.asarray(params["bn_gamma"], jnp.float32)
    beta = jnp.asarray(params["bn_beta"], jnp.float32)
    rmean = jnp.asarray(params["bn_mean"], jnp.float32)
    rvar = jnp.asarray(params["bn_var"], jnp.float32)
    b1 = jnp.asarray(params["b1"], jnp.float32)
    wf = jnp.asarray(params["wf"], jnp.float32)                      # (NC, EMB)
    bf = jnp.asarray(params["bf"], jnp.float32)

    scale = gamma / jnp.sqrt(rvar + eps)                             # (EMB,)
    w1_fold = w1 * scale[:, None]
    b_fold = (b1 - rmean) * scale + beta

    emb, two_c = w1.shape
    c = two_c // 2
    nc = wf.shape[0]
    emb_pad = _round_up(emb, 128)
    nc_pad = _round_up(nc, 128)

    w1t = jnp.pad(w1_fold.T, ((0, 0), (0, emb_pad - emb)))           # (2C, EMB_PAD)
    return {
        "w1t_mean": w1t[:c],                                         # (C, EMB_PAD)
        "w1t_std": w1t[c:],                                          # (C, EMB_PAD)
        "b_fold": jnp.pad(b_fold, (0, emb_pad - emb)).reshape(1, emb_pad),
        "wft": jnp.pad(wf.T, ((0, emb_pad - emb), (0, nc_pad - nc))),  # (EMB_PAD, NC_PAD)
        "bf": jnp.pad(bf, (0, nc_pad - nc)).reshape(1, nc_pad),
        "emb_size": int(emb),
        "num_classes": int(nc),
    }


def _pick_t_block(C, T, itemsize, budget_bytes, n_buf=2, max_lanes=2048):
    """Largest multiple of 128 (<= T, <= max_lanes) whose n_buf input buffers fit the budget.
    With the ceil-div + masked-tail grid, T_BLK no longer has to divide T."""
    if T <= 128:
        return T                                   # single block equal to the full dim
    per_lane = n_buf * C * itemsize
    max_blk = max(128, (budget_bytes // per_lane) // 128 * 128)
    t_floor = (T // 128) * 128                     # never exceed the array extent
    return int(min(max_blk, t_floor, max_lanes))


# ---------------------------------------------------------------------------
# Forward wrapper
# ---------------------------------------------------------------------------
def speaker_decoder_forward(x, prep, *, t_block=None):
    """x: (B, C, T) f32 or bf16 activations.  prep: output of prepare_params.
    Returns (logits (B, num_classes), emb (B, emb_size)), both f32.
    Note: T == 1 yields NaN std (matches torch's unbiased std semantics)."""
    x = jnp.asarray(x)                                    # no dtype cast: stream bf16 directly
    B, C, T = x.shape
    emb_size, nc = prep["emb_size"], prep["num_classes"]
    emb_pad, nc_pad = prep["w1t_mean"].shape[1], prep["wft"].shape[1]
    itemsize = jnp.dtype(x.dtype).itemsize

    # Generation-aware VMEM budgets (128 MiB on v5e/v6e, 64 MiB on v7x).
    cap = _vmem_capacity_bytes()
    head_bytes = 4 * (prep["w1t_mean"].size + prep["w1t_std"].size + prep["b_fold"].size
                      + prep["wft"].size + prep["bf"].size)
    stream_budget = max(4 * 1024 * 1024, int(cap * 0.6) - head_bytes)
    t_blk = _pick_t_block(C, T, itemsize, stream_budget) if t_block is None else int(t_block)
    assert 0 < t_blk <= T and (t_blk == T or t_blk % 128 == 0), (T, t_blk)
    n_t = pl.cdiv(T, t_blk)
    tail_len = T - (n_t - 1) * t_blk                       # == t_blk when T % t_blk == 0

    inv_tm1 = 1.0 / (T - 1) if T > 1 else float("nan")

    # Leave headroom below physical VMEM for compiler scratch (e.g. ~54 MiB of 64 on v7x).
    vmem_limit = max(16 * 1024 * 1024, min(int(cap * 0.85), cap - 8 * 1024 * 1024))

    cost = pl.CostEstimate(
        flops=int(4 * B * C * T + 2 * B * (2 * C) * emb_pad + 2 * B * emb_pad * nc_pad),
        transcendentals=int(B * C),
        bytes_accessed=int(itemsize * B * C * T + head_bytes + 4 * B * (emb_pad + nc_pad)),
    )

    kernel = functools.partial(_fused_decoder_kernel, t_blk=t_blk, tail_len=int(tail_len),
                               inv_tm1=inv_tm1)

    def call(head_mode):
        def hspec(shape):
            # Head weights/biases: constant block index -> resident in VMEM.  head_mode=Buffered(1)
            # avoids the pointless second buffer (saves ~11 MiB at TitaNet sizes).
            if head_mode is None:
                return pl.BlockSpec(shape, lambda b, t: (0, 0))
            return pl.BlockSpec(shape, lambda b, t: (0, 0), pipeline_mode=head_mode)

        return pl.pallas_call(
            kernel,
            out_shape=(
                jax.ShapeDtypeStruct((B, 1, nc_pad), jnp.float32),
                jax.ShapeDtypeStruct((B, 1, emb_pad), jnp.float32),
            ),
            grid_spec=pltpu.PrefetchScalarGridSpec(
                num_scalar_prefetch=0,
                grid=(B, n_t),
                in_specs=[
                    # Streamed activations; default double-buffering overlaps the HBM DMA.
                    # TODO(synk): sweep pipeline_mode=pl.Buffered(3) here once profiled.
                    pl.BlockSpec((1, C, t_blk), lambda b, t: (b, 0, t)),
                    hspec((C, emb_pad)),          # W1 (mean half), BN-folded
                    hspec((C, emb_pad)),          # W1 (std half), BN-folded
                    hspec((1, emb_pad)),          # folded bias
                    hspec((emb_pad, nc_pad)),     # final weight
                    hspec((1, nc_pad)),           # final bias
                ],
                out_specs=(
                    pl.BlockSpec((1, 1, nc_pad), lambda b, t: (b, 0, 0)),
                    pl.BlockSpec((1, 1, emb_pad), lambda b, t: (b, 0, 0)),
                ),
                scratch_shapes=[
                    pltpu.VMEM((1, C), jnp.float32),   # running mean
                    pltpu.VMEM((1, C), jnp.float32),   # running M2 (sum of squared deviations)
                ],
            ),
            compiler_params=pltpu.CompilerParams(
                dimension_semantics=("parallel", "arbitrary"),
                vmem_limit_bytes=int(vmem_limit),
            ),
            cost_estimate=cost,
        )(x, prep["w1t_mean"], prep["w1t_std"], prep["b_fold"], prep["wft"], prep["bf"])

    try:
        logits3, emb3 = call(pl.Buffered(1))
    except Exception:
        # Some Pallas builds reject single-buffered pipeline_mode; fall back to the default.
        logits3, emb3 = call(None)

    return (logits3.reshape(B, nc_pad)[:, :nc],
            emb3.reshape(B, emb_pad)[:, :emb_size])


# ---------------------------------------------------------------------------
# Pure-JAX reference (unfolded params) for verification
# ---------------------------------------------------------------------------
def reference_forward(x, params):
    mean = jnp.mean(x, axis=-1)
    std = jnp.sqrt(jnp.sum((x - mean[:, :, None]) ** 2, axis=-1) / (x.shape[-1] - 1))
    pool = jnp.concatenate([mean, std], axis=-1)
    h = pool @ params["w1"].T + params["b1"]
    emb = ((h - params["bn_mean"]) / jnp.sqrt(params["bn_var"] + BN_EPS)
           * params["bn_gamma"] + params["bn_beta"])
    act = jnp.maximum(emb, 0.0)
    logits = act @ params["wf"].T + params["bf"]
    return logits, emb


if __name__ == "__main__":
    B, FEAT_IN = 2, 16
    EMB, NUM_CLASSES = 32, 8

    key = jax.random.PRNGKey(0)
    k_x1, k_x2, k_w1, k_b1, k_g, k_bb, k_wf, k_bf = jax.random.split(key, 8)

    params = {
        # emb layer: Linear(2*FEAT_IN -> EMB) + BatchNorm1d(EMB)
        "w1": jax.random.normal(k_w1, (EMB, 2 * FEAT_IN), jnp.float32) * 0.1,
        "b1": jax.random.normal(k_b1, (EMB,), jnp.float32) * 0.1,
        "bn_gamma": 1.0 + 0.1 * jax.random.normal(k_g, (EMB,), jnp.float32),
        "bn_beta": 0.1 * jax.random.normal(k_bb, (EMB,), jnp.float32),
        "bn_mean": jnp.zeros((EMB,), jnp.float32),
        "bn_var": jnp.ones((EMB,), jnp.float32),
        # final: Linear(EMB -> NUM_CLASSES), bias=True (angular=False)
        "wf": jax.random.normal(k_wf, (NUM_CLASSES, EMB), jnp.float32) * 0.1,
        "bf": jax.random.normal(k_bf, (NUM_CLASSES,), jnp.float32) * 0.1,
    }
    prep = prepare_params(params)

    # --- f32 input, T a multiple of the block: plain multi-block streaming path ------------
    T1 = 256
    x1 = jax.random.normal(k_x1, (B, FEAT_IN, T1), jnp.float32)
    logits1, emb1 = speaker_decoder_forward(x1, prep, t_block=128)
    jax.block_until_ready((logits1, emb1))
    ref_l1, ref_e1 = reference_forward(x1, params)
    assert logits1.shape == (B, NUM_CLASSES) and emb1.shape == (B, EMB)
    assert jnp.allclose(logits1, ref_l1, atol=1e-4, rtol=1e-4)
    assert jnp.allclose(emb1, ref_e1, atol=1e-4, rtol=1e-4)

    # --- bf16 input, T NOT a multiple of 128: masked-tail (ceil-div grid) path --------------
    T2 = 200
    x2 = jax.random.normal(k_x2, (B, FEAT_IN, T2), jnp.float32).astype(jnp.bfloat16)
    logits2, emb2 = speaker_decoder_forward(x2, prep, t_block=128)
    jax.block_until_ready((logits2, emb2))
    ref_l2, ref_e2 = reference_forward(x2.astype(jnp.float32), params)
    assert jnp.allclose(logits2, ref_l2, atol=2e-3, rtol=2e-3)
    assert jnp.allclose(emb2, ref_e2, atol=2e-3, rtol=2e-3)

    print("KERNEL_OK")
</pallas_src>

<mosaic_0001>
module attributes {stable_mosaic.version = 11 : i64} {
  func.func @_fused_decoder_kernel(%arg0: i32, %arg1: i32, %arg2: memref<1x16x128xf32, #tpu.memory_space<vmem>>, %arg3: memref<16x128xf32, #tpu.memory_space<vmem>>, %arg4: memref<16x128xf32, #tpu.memory_space<vmem>>, %arg5: memref<1x128xf32, #tpu.memory_space<vmem>>, %arg6: memref<128x128xf32, #tpu.memory_space<vmem>>, %arg7: memref<1x128xf32, #tpu.memory_space<vmem>>, %arg8: memref<1x1x128xf32, #tpu.memory_space<vmem>>, %arg9: memref<1x1x128xf32, #tpu.memory_space<vmem>>, %arg10: memref<1x16xf32, #tpu.memory_space<vmem>>, %arg11: memref<1x16xf32, #tpu.memory_space<vmem>>) attributes {dimension_semantics = [#tpu.dimension_semantics<parallel>, #tpu.dimension_semantics<arbitrary>], iteration_bounds = array<i64: 2, 2>, scalar_prefetch = 0 : i64, scratch_operands = 2 : i64, tpu.core_type = #tpu.core_type<tc>, window_params = [{transform_indices = @transform_0, window_bounds = array<i64: 1, 16, 128>}, {pipeline_mode = #tpu.pipeline_mode<synchronous>, transform_indices = @transform_1, window_bounds = array<i64: 16, 128>}, {pipeline_mode = #tpu.pipeline_mode<synchronous>, transform_indices = @transform_2, window_bounds = array<i64: 16, 128>}, {pipeline_mode = #tpu.pipeline_mode<synchronous>, transform_indices = @transform_3, window_bounds = array<i64: 1, 128>}, {pipeline_mode = #tpu.pipeline_mode<synchronous>, transform_indices = @transform_4, window_bounds = array<i64: 128, 128>}, {pipeline_mode = #tpu.pipeline_mode<synchronous>, transform_indices = @transform_5, window_bounds = array<i64: 1, 128>}, {transform_indices = @transform_6, window_bounds = array<i64: 1, 1, 128>}, {transform_indices = @transform_7, window_bounds = array<i64: 1, 1, 128>}]} {
    %c0_i32 = arith.constant 0 : i32
    %0 = arith.cmpi eq, %arg1, %c0_i32 : i32
    %1 = arith.extui %0 : i1 to i32
    %c0_i32_0 = arith.constant 0 : i32
    %2 = arith.cmpi ne, %1, %c0_i32_0 : i32
    scf.if %2 {
      %cst_19 = arith.constant 0.000000e+00 : f32
      %34 = vector.broadcast %cst_19 : f32 to vector<1x16xf32>
      %c0_20 = arith.constant 0 : index
      %c0_21 = arith.constant 0 : index
      %35 = vector.load %arg10[%c0_20, %c0_21] : memref<1x16xf32, #tpu.memory_space<vmem>>, vector<1x16xf32>
      tpu.vector_store %arg10[%c0_20, %c0_21], %34 {strides = array<i32>} : memref<1x16xf32, #tpu.memory_space<vmem>>, vector<1x16xf32>,
      %cst_22 = arith.constant 0.000000e+00 : f32
      %36 = vector.broadcast %cst_22 : f32 to vector<1x16xf32>
      %c0_23 = arith.constant 0 : index
      %c0_24 = arith.constant 0 : index
      %37 = vector.load %arg11[%c0_23, %c0_24] : memref<1x16xf32, #tpu.memory_space<vmem>>, vector<1x16xf32>
      tpu.vector_store %arg11[%c0_23, %c0_24], %36 {strides = array<i32>} : memref<1x16xf32, #tpu.memory_space<vmem>>, vector<1x16xf32>,
    } else {
    }
    %c0 = arith.constant 0 : index
    %c0_1 = arith.constant 0 : index
    %c0_2 = arith.constant 0 : index
    %3 = vector.load %arg2[%c0, %c0_1, %c0_2] : memref<1x16x128xf32, #tpu.memory_space<vmem>>, vector<1x16x128xf32>
    %cst = arith.constant dense<0.000000e+00> : vector<1x16xf32>
    %4 = vector.multi_reduction <add>, %3, %cst [2] : vector<1x16x128xf32> to vector<1x16xf32>
    %5 = arith.mulf %3, %3 : vector<1x16x128xf32>
    %cst_3 = arith.constant dense<0.000000e+00> : vector<1x16xf32>
    %6 = vector.multi_reduction <add>, %5, %cst_3 [2] : vector<1x16x128xf32> to vector<1x16xf32>
    %c128_i32 = arith.constant 128 : i32
    %7 = arith.muli %arg1, %c128_i32 : i32
    %8 = arith.sitofp %7 : i32 to f32
    %cst_4 = arith.constant 1.280000e+02 : f32
    %9 = arith.addf %8, %cst_4 : f32
    %cst_5 = arith.constant 7.812500e-03 : f32
    %10 = vector.broadcast %cst_5 : f32 to vector<1x16xf32>
    %11 = arith.mulf %4, %10 : vector<1x16xf32>
    %12 = arith.mulf %4, %11 : vector<1x16xf32>
    %13 = arith.subf %6, %12 : vector<1x16xf32>
    %c0_6 = arith.constant 0 : index
    %c0_7 = arith.constant 0 : index
    %14 = vector.load %arg10[%c0_6, %c0_7] : memref<1x16xf32, #tpu.memory_space<vmem>>, vector<1x16xf32>
    %15 = arith.subf %11, %14 : vector<1x16xf32>
    %c0_8 = arith.constant 0 : index
    %c0_9 = arith.constant 0 : index
    %16 = vector.load %arg10[%c0_8, %c0_9] : memref<1x16xf32, #tpu.memory_space<vmem>>, vector<1x16xf32>
    %cst_10 = arith.constant 1.280000e+02 : f32
    %17 = arith.divf %cst_10, %9 : f32
    %18 = vector.broadcast %17 : f32 to vector<1x16xf32>
    %19 = arith.mulf %15, %18 : vector<1x16xf32>
    %20 = arith.addf %16, %19 : vector<1x16xf32>
    %c0_11 = arith.constant 0 : index
    %c0_12 = arith.constant 0 : index
    %21 = vector.load %arg10[%c0_11, %c0_12] : memref<1x16xf32, #tpu.memory_space<vmem>>, vector<1x16xf32>
    tpu.vector_store %arg10[%c0_11, %c0_12], %20 {strides = array<i32>} : memref<1x16xf32, #tpu.memory_space<vmem>>, vector<1x16xf32>,
    %c0_13 = arith.constant 0 : index
    %c0_14 = arith.constant 0 : index
    %22 = vector.load %arg11[%c0_13, %c0_14] : memref<1x16xf32, #tpu.memory_space<vmem>>, vector<1x16xf32>
    %23 = arith.mulf %15, %15 : vector<1x16xf32>
    %cst_15 = arith.constant 1.280000e+02 : f32
    %24 = arith.mulf %8, %cst_15 : f32
    %25 = arith.divf %24, %9 : f32
    %26 = vector.broadcast %25 : f32 to vector<1x16xf32>
    %27 = arith.mulf %23, %26 : vector<1x16xf32>
    %28 = arith.addf %13, %27 : vector<1x16xf32>
    %29 = arith.addf %22, %28 : vector<1x16xf32>
    %c0_16 = arith.constant 0 : index
    %c0_17 = arith.constant 0 : index
    %30 = vector.load %arg11[%c0_16, %c0_17] : memref<1x16xf32, #tpu.memory_space<vmem>>, vector<1x16xf32>
    tpu.vector_store %arg11[%c0_16, %c0_17], %29 {strides = array<i32>} : memref<1x16xf32, #tpu.memory_space<vmem>>, vector<1x16xf32>,
    %c1_i32 = arith.constant 1 : i32
    %31 = arith.cmpi eq, %arg1, %c1_i32 : i32
    %32 = arith.extui %31 : i1 to i32
    %c0_i32_18 = arith.constant 0 : i32
    %33 = arith.cmpi ne, %32, %c0_i32_18 : i32
    scf.if %33 {
      %c0_19 = arith.constant 0 : index
      %c0_20 = arith.constant 0 : index
      %34 = vector.load %arg10[%c0_19, %c0_20] : memref<1x16xf32, #tpu.memory_space<vmem>>, vector<1x16xf32>
      %c0_21 = arith.constant 0 : index
      %c0_22 = arith.constant 0 : index
      %35 = vector.load %arg11[%c0_21, %c0_22] : memref<1x16xf32, #tpu.memory_space<vmem>>, vector<1x16xf32>
      %cst_23 = arith.constant 0.00392156886 : f32
      %36 = vector.broadcast %cst_23 : f32 to vector<1x16xf32>
      %37 = arith.mulf %35, %36 : vector<1x16xf32>
      %cst_24 = arith.constant 0.000000e+00 : f32
      %38 = vector.broadcast %cst_24 : f32 to vector<1x16xf32>
      %39 = arith.maximumf %37, %38 : vector<1x16xf32>
      %40 = math.sqrt %39 : vector<1x16xf32>
      %c0_25 = arith.constant 0 : index
      %c0_26 = arith.constant 0 : index
      %41 = vector.load %arg3[%c0_25, %c0_26] : memref<16x128xf32, #tpu.memory_space<vmem>>, vector<16x128xf32>
      %cst_27 = arith.constant dense<0.000000e+00> : vector<1x128xf32>
      %42 = tpu.matmul %34, %41, %cst_27 {dimension_numbers = #tpu.dot_dimension_numbers<[1], [0], [0], [1], [0, 0, 1, 1], [], []>} : vector<1x16xf32>, vector<16x128xf32>, vector<1x128xf32> -> vector<1x128xf32>
      %c0_28 = arith.constant 0 : index
      %c0_29 = arith.constant 0 : index
      %43 = vector.load %arg4[%c0_28, %c0_29] : memref<16x128xf32, #tpu.memory_space<vmem>>, vector<16x128xf32>
      %cst_30 = arith.constant dense<0.000000e+00> : vector<1x128xf32>
      %44 = tpu.matmul %40, %43, %cst_30 {dimension_numbers = #tpu.dot_dimension_numbers<[1], [0], [0], [1], [0, 0, 1, 1], [], []>} : vector<1x16xf32>, vector<16x128xf32>, vector<1x128xf32> -> vector<1x128xf32>
      %45 = arith.addf %42, %44 : vector<1x128xf32>
      %c0_31 = arith.constant 0 : index
      %c0_32 = arith.constant 0 : index
      %46 = vector.load %arg5[%c0_31, %c0_32] : memref<1x128xf32, #tpu.memory_space<vmem>>, vector<1x128xf32>
      %47 = arith.addf %45, %46 : vector<1x128xf32>
      %48 = vector.shape_cast %47 : vector<1x128xf32> to vector<1x1x128xf32>
      %c0_33 = arith.constant 0 : index
      %c0_34 = arith.constant 0 : index
      %c0_35 = arith.constant 0 : index
      %49 = vector.load %arg9[%c0_33, %c0_34, %c0_35] : memref<1x1x128xf32, #tpu.memory_space<vmem>>, vector<1x1x128xf32>
      tpu.vector_store %arg9[%c0_33, %c0_34, %c0_35], %48 {strides = array<i32>} : memref<1x1x128xf32, #tpu.memory_space<vmem>>, vector<1x1x128xf32>,
      %cst_36 = arith.constant 0.000000e+00 : f32
      %50 = vector.broadcast %cst_36 : f32 to vector<1x128xf32>
      %51 = arith.maximumf %47, %50 : vector<1x128xf32>
      %c0_37 = arith.constant 0 : index
      %c0_38 = arith.constant 0 : index
      %52 = vector.load %arg6[%c0_37, %c0_38] : memref<128x128xf32, #tpu.memory_space<vmem>>, vector<128x128xf32>
      %cst_39 = arith.constant dense<0.000000e+00> : vector<1x128xf32>
      %53 = tpu.matmul %51, %52, %cst_39 {dimension_numbers = #tpu.dot_dimension_numbers<[1], [0], [0], [1], [0, 0, 1, 1], [], []>} : vector<1x128xf32>, vector<128x128xf32>, vector<1x128xf32> -> vector<1x128xf32>
      %c0_40 = arith.constant 0 : index
      %c0_41 = arith.constant 0 : index
      %54 = vector.load %arg7[%c0_40, %c0_41] : memref<1x128xf32, #tpu.memory_space<vmem>>, vector<1x128xf32>
      %55 = arith.addf %53, %54 : vector<1x128xf32>
      %56 = vector.shape_cast %55 : vector<1x128xf32> to vector<1x1x128xf32>
      %c0_42 = arith.constant 0 : index
      %c0_43 = arith.constant 0 : index
      %c0_44 = arith.constant 0 : index
      %57 = vector.load %arg8[%c0_42, %c0_43, %c0_44] : memref<1x1x128xf32, #tpu.memory_space<vmem>>, vector<1x1x128xf32>
      tpu.vector_store %arg8[%c0_42, %c0_43, %c0_44], %56 {strides = array<i32>} : memref<1x1x128xf32, #tpu.memory_space<vmem>>, vector<1x1x128xf32>,
    } else {
    }
    return
  }
  func.func @transform_0(%arg0: i32, %arg1: i32) -> (i32, i32, i32) {
    %c0_i32 = arith.constant 0 : i32
    %c0_i32_0 = arith.constant 0 : i32
    return %arg0, %c0_i32, %arg1 : i32, i32, i32
  }
  func.func @transform_1(%arg0: i32, %arg1: i32) -> (i32, i32) {
    %c0_i32 = arith.constant 0 : i32
    %c0_i32_0 = arith.constant 0 : i32
    %c0_i32_1 = arith.constant 0 : i32
    return %c0_i32, %c0_i32_0 : i32, i32
  }
  func.func @transform_2(%arg0: i32, %arg1: i32) -> (i32, i32) {
    %c0_i32 = arith.constant 0 : i32
    %c0_i32_0 = arith.constant 0 : i32
    %c0_i32_1 = arith.constant 0 : i32
    return %c0_i32, %c0_i32_0 : i32, i32
  }
  func.func @transform_3(%arg0: i32, %arg1: i32) -> (i32, i32) {
    %c0_i32 = arith.constant 0 : i32
    %c0_i32_0 = arith.constant 0 : i32
    %c0_i32_1 = arith.constant 0 : i32
    return %c0_i32, %c0_i32_0 : i32, i32
  }
  func.func @transform_4(%arg0: i32, %arg1: i32) -> (i32, i32) {
    %c0_i32 = arith.constant 0 : i32
    %c0_i32_0 = arith.constant 0 : i32
    %c0_i32_1 = arith.constant 0 : i32
    return %c0_i32, %c0_i32_0 : i32, i32
  }
  func.func @transform_5(%arg0: i32, %arg1: i32) -> (i32, i32) {
    %c0_i32 = arith.constant 0 : i32
    %c0_i32_0 = arith.constant 0 : i32
    %c0_i32_1 = arith.constant 0 : i32
    return %c0_i32, %c0_i32_0 : i32, i32
  }
  func.func @transform_6(%arg0: i32, %arg1: i32) -> (i32, i32, i32) {
    %c0_i32 = arith.constant 0 : i32
    %c0_i32_0 = arith.constant 0 : i32
    %c0_i32_1 = arith.constant 0 : i32
    return %arg0, %c0_i32, %c0_i32_0 : i32, i32, i32
  }
  func.func @transform_7(%arg0: i32, %arg1: i32) -> (i32, i32, i32) {
    %c0_i32 = arith.constant 0 : i32
    %c0_i32_0 = arith.constant 0 : i32
    %c0_i32_1 = arith.constant 0 : i32
    return %arg0, %c0_i32, %c0_i32_0 : i32, i32, i32
  }
}

module attributes {stable_mosaic.version = 11 : i64} {
  func.func @_fused_decoder_kernel(%arg0: i32, %arg1: i32, %arg2: memref<1x16x128xf32, #tpu.memory_space<vmem>>, %arg3: memref<16x128xf32, #tpu.memory_space<vmem>>, %arg4: memref<16x128xf32, #tpu.memory_space<vmem>>, %arg5: memref<1x128xf32, #tpu.memory_space<vmem>>, %arg6: memref<128x128xf32, #tpu.memory_space<vmem>>, %arg7: memref<1x128xf32, #tpu.memory_space<vmem>>, %arg8: memref<1x1x128xf32, #tpu.memory_space<vmem>>, %arg9: memref<1x1x128xf32, #tpu.memory_space<vmem>>, %arg10: memref<1x16xf32, #tpu.memory_space<vmem>>, %arg11: memref<1x16xf32, #tpu.memory_space<vmem>>) attributes {dimension_semantics = [#tpu.dimension_semantics<parallel>, #tpu.dimension_semantics<arbitrary>], iteration_bounds = array<i64: 2, 2>, scalar_prefetch = 0 : i64, scratch_operands = 2 : i64, tpu.core_type = #tpu.core_type<tc>, window_params = [{transform_indices = @transform_0, window_bounds = array<i64: 1, 16, 128>}, {pipeline_mode = #tpu.pipeline_mode<synchronous>, transform_indices = @transform_1, window_bounds = array<i64: 16, 128>}, {pipeline_mode = #tpu.pipeline_mode<synchronous>, transform_indices = @transform_2, window_bounds = array<i64: 16, 128>}, {pipeline_mode = #tpu.pipeline_mode<synchronous>, transform_indices = @transform_3, window_bounds = array<i64: 1, 128>}, {pipeline_mode = #tpu.pipeline_mode<synchronous>, transform_indices = @transform_4, window_bounds = array<i64: 128, 128>}, {pipeline_mode = #tpu.pipeline_mode<synchronous>, transform_indices = @transform_5, window_bounds = array<i64: 1, 128>}, {transform_indices = @transform_6, window_bounds = array<i64: 1, 1, 128>}, {transform_indices = @transform_7, window_bounds = array<i64: 1, 1, 128>}]} {
    %c0_i32 = arith.constant 0 : i32
    %0 = arith.cmpi eq, %arg1, %c0_i32 : i32
    %1 = arith.extui %0 : i1 to i32
    %c0_i32_0 = arith.constant 0 : i32
    %2 = arith.cmpi ne, %1, %c0_i32_0 : i32
    scf.if %2 {
      %cst_19 = arith.constant 0.000000e+00 : f32
      %34 = vector.broadcast %cst_19 : f32 to vector<1x16xf32>
      %c0_20 = arith.constant 0 : index
      %c0_21 = arith.constant 0 : index
      %35 = vector.load %arg10[%c0_20, %c0_21] : memref<1x16xf32, #tpu.memory_space<vmem>>, vector<1x16xf32>
      tpu.vector_store %arg10[%c0_20, %c0_21], %34 {strides = array<i32>} : memref<1x16xf32, #tpu.memory_space<vmem>>, vector<1x16xf32>,
      %cst_22 = arith.constant 0.000000e+00 : f32
      %36 = vector.broadcast %cst_22 : f32 to vector<1x16xf32>
      %c0_23 = arith.constant 0 : index
      %c0_24 = arith.constant 0 : index
      %37 = vector.load %arg11[%c0_23, %c0_24] : memref<1x16xf32, #tpu.memory_space<vmem>>, vector<1x16xf32>
      tpu.vector_store %arg11[%c0_23, %c0_24], %36 {strides = array<i32>} : memref<1x16xf32, #tpu.memory_space<vmem>>, vector<1x16xf32>,
    } else {
    }
    %c0 = arith.constant 0 : index
    %c0_1 = arith.constant 0 : index
    %c0_2 = arith.constant 0 : index
    %3 = vector.load %arg2[%c0, %c0_1, %c0_2] : memref<1x16x128xf32, #tpu.memory_space<vmem>>, vector<1x16x128xf32>
    %cst = arith.constant dense<0.000000e+00> : vector<1x16xf32>
    %4 = vector.multi_reduction <add>, %3, %cst [2] : vector<1x16x128xf32> to vector<1x16xf32>
    %5 = arith.mulf %3, %3 : vector<1x16x128xf32>
    %cst_3 = arith.constant dense<0.000000e+00> : vector<1x16xf32>
    %6 = vector.multi_reduction <add>, %5, %cst_3 [2] : vector<1x16x128xf32> to vector<1x16xf32>
    %c128_i32 = arith.constant 128 : i32
    %7 = arith.muli %arg1, %c128_i32 : i32
    %8 = arith.sitofp %7 : i32 to f32
    %cst_4 = arith.constant 1.280000e+02 : f32
    %9 = arith.addf %8, %cst_4 : f32
    %cst_5 = arith.constant 7.812500e-03 : f32
    %10 = vector.broadcast %cst_5 : f32 to vector<1x16xf32>
    %11 = arith.mulf %4, %10 : vector<1x16xf32>
    %12 = arith.mulf %4, %11 : vector<1x16xf32>
    %13 = arith.subf %6, %12 : vector<1x16xf32>
    %c0_6 = arith.constant 0 : index
    %c0_7 = arith.constant 0 : index
    %14 = vector.load %arg10[%c0_6, %c0_7] : memref<1x16xf32, #tpu.memory_space<vmem>>, vector<1x16xf32>
    %15 = arith.subf %11, %14 : vector<1x16xf32>
    %c0_8 = arith.constant 0 : index
    %c0_9 = arith.constant 0 : index
    %16 = vector.load %arg10[%c0_8, %c0_9] : memref<1x16xf32, #tpu.memory_space<vmem>>, vector<1x16xf32>
    %cst_10 = arith.constant 1.280000e+02 : f32
    %17 = arith.divf %cst_10, %9 : f32
    %18 = vector.broadcast %17 : f32 to vector<1x16xf32>
    %19 = arith.mulf %15, %18 : vector<1x16xf32>
    %20 = arith.addf %16, %19 : vector<1x16xf32>
    %c0_11 = arith.constant 0 : index
    %c0_12 = arith.constant 0 : index
    %21 = vector.load %arg10[%c0_11, %c0_12] : memref<1x16xf32, #tpu.memory_space<vmem>>, vector<1x16xf32>
    tpu.vector_store %arg10[%c0_11, %c0_12], %20 {strides = array<i32>} : memref<1x16xf32, #tpu.memory_space<vmem>>, vector<1x16xf32>,
    %c0_13 = arith.constant 0 : index
    %c0_14 = arith.constant 0 : index
    %22 = vector.load %arg11[%c0_13, %c0_14] : memref<1x16xf32, #tpu.memory_space<vmem>>, vector<1x16xf32>
    %23 = arith.mulf %15, %15 : vector<1x16xf32>
    %cst_15 = arith.constant 1.280000e+02 : f32
    %24 = arith.mulf %8, %cst_15 : f32
    %25 = arith.divf %24, %9 : f32
    %26 = vector.broadcast %25 : f32 to vector<1x16xf32>
    %27 = arith.mulf %23, %26 : vector<1x16xf32>
    %28 = arith.addf %13, %27 : vector<1x16xf32>
    %29 = arith.addf %22, %28 : vector<1x16xf32>
    %c0_16 = arith.constant 0 : index
    %c0_17 = arith.constant 0 : index
    %30 = vector.load %arg11[%c0_16, %c0_17] : memref<1x16xf32, #tpu.memory_space<vmem>>, vector<1x16xf32>
    tpu.vector_store %arg11[%c0_16, %c0_17], %29 {strides = array<i32>} : memref<1x16xf32, #tpu.memory_space<vmem>>, vector<1x16xf32>,
    %c1_i32 = arith.constant 1 : i32
    %31 = arith.cmpi eq, %arg1, %c1_i32 : i32
    %32 = arith.extui %31 : i1 to i32
    %c0_i32_18 = arith.constant 0 : i32
    %33 = arith.cmpi ne, %32, %c0_i32_18 : i32
    scf.if %33 {
      %c0_19 = arith.constant 0 : index
      %c0_20 = arith.constant 0 : index
      %34 = vector.load %arg10[%c0_19, %c0_20] : memref<1x16xf32, #tpu.memory_space<vmem>>, vector<1x16xf32>
      %c0_21 = arith.constant 0 : index
      %c0_22 = arith.constant 0 : index
      %35 = vector.load %arg11[%c0_21, %c0_22] : memref<1x16xf32, #tpu.memory_space<vmem>>, vector<1x16xf32>
      %cst_23 = arith.constant 0.00392156886 : f32
      %36 = vector.broadcast %cst_23 : f32 to vector<1x16xf32>
      %37 = arith.mulf %35, %36 : vector<1x16xf32>
      %cst_24 = arith.constant 0.000000e+00 : f32
      %38 = vector.broadcast %cst_24 : f32 to vector<1x16xf32>
      %39 = arith.maximumf %37, %38 : vector<1x16xf32>
      %40 = math.sqrt %39 : vector<1x16xf32>
      %c0_25 = arith.constant 0 : index
      %c0_26 = arith.constant 0 : index
      %41 = vector.load %arg3[%c0_25, %c0_26] : memref<16x128xf32, #tpu.memory_space<vmem>>, vector<16x128xf32>
      %cst_27 = arith.constant dense<0.000000e+00> : vector<1x128xf32>
      %42 = tpu.matmul %34, %41, %cst_27 {dimension_numbers = #tpu.dot_dimension_numbers<[1], [0], [0], [1], [0, 0, 1, 1], [], []>} : vector<1x16xf32>, vector<16x128xf32>, vector<1x128xf32> -> vector<1x128xf32>
      %c0_28 = arith.constant 0 : index
      %c0_29 = arith.constant 0 : index
      %43 = vector.load %arg4[%c0_28, %c0_29] : memref<16x128xf32, #tpu.memory_space<vmem>>, vector<16x128xf32>
      %cst_30 = arith.constant dense<0.000000e+00> : vector<1x128xf32>
      %44 = tpu.matmul %40, %43, %cst_30 {dimension_numbers = #tpu.dot_dimension_numbers<[1], [0], [0], [1], [0, 0, 1, 1], [], []>} : vector<1x16xf32>, vector<16x128xf32>, vector<1x128xf32> -> vector<1x128xf32>
      %45 = arith.addf %42, %44 : vector<1x128xf32>
      %c0_31 = arith.constant 0 : index
      %c0_32 = arith.constant 0 : index
      %46 = vector.load %arg5[%c0_31, %c0_32] : memref<1x128xf32, #tpu.memory_space<vmem>>, vector<1x128xf32>
      %47 = arith.addf %45, %46 : vector<1x128xf32>
      %48 = vector.shape_cast %47 : vector<1x128xf32> to vector<1x1x128xf32>
      %c0_33 = arith.constant 0 : index
      %c0_34 = arith.constant 0 : index
      %c0_35 = arith.constant 0 : index
      %49 = vector.load %arg9[%c0_33, %c0_34, %c0_35] : memref<1x1x128xf32, #tpu.memory_space<vmem>>, vector<1x1x128xf32>
      tpu.vector_store %arg9[%c0_33, %c0_34, %c0_35], %48 {strides = array<i32>} : memref<1x1x128xf32, #tpu.memory_space<vmem>>, vector<1x1x128xf32>,
      %cst_36 = arith.constant 0.000000e+00 : f32
      %50 = vector.broadcast %cst_36 : f32 to vector<1x128xf32>
      %51 = arith.maximumf %47, %50 : vector<1x128xf32>
      %c0_37 = arith.constant 0 : index
      %c0_38 = arith.constant 0 : index
      %52 = vector.load %arg6[%c0_37, %c0_38] : memref<128x128xf32, #tpu.memory_space<vmem>>, vector<128x128xf32>
      %cst_39 = arith.constant dense<0.000000e+00> : vector<1x128xf32>
      %53 = tpu.matmul %51, %52, %cst_39 {dimension_numbers = #tpu.dot_dimension_numbers<[1], [0], [0], [1], [0, 0, 1, 1], [], []>} : vector<1x128xf32>, vector<128x128xf32>, vector<1x128xf32> -> vector<1x128xf32>
      %c0_40 = arith.constant 0 : index
      %c0_41 = arith.constant 0 : index
      %54 = vector.load %arg7[%c0_40, %c0_41] : memref<1x128xf32, #tpu.memory_space<vmem>>, vector<1x128xf32>
      %55 = arith.addf %53, %54 : vector<1x128xf32>
      %56 = vector.shape_cast %55 : vector<1x128xf32> to vector<1x1x128xf32>
      %c0_42 = arith.constant 0 : index
      %c0_43 = arith.constant 0 : index
      %c0_44 = arith.constant 0 : index
      %57 = vector.load %arg8[%c0_42, %c0_43, %c0_44] : memref<1x1x128xf32, #tpu.memory_space<vmem>>, vector<1x1x128xf32>
      tpu.vector_store %arg8[%c0_42, %c0_43, %c0_44], %56 {strides = array<i32>} : memref<1x1x128xf32, #tpu.memory_space<vmem>>, vector<1x1x128xf32>,
    } else {
    }
    return
  }
  func.func @transform_0(%arg0: i32, %arg1: i32) -> (i32, i32, i32) {
    %c0_i32 = arith.constant 0 : i32
    %c0_i32_0 = arith.constant 0 : i32
    return %arg0, %c0_i32, %arg1 : i32, i32, i32
  }
  func.func @transform_1(%arg0: i32, %arg1: i32) -> (i32, i32) {
    %c0_i32 = arith.constant 0 : i32
    %c0_i32_0 = arith.constant 0 : i32
    %c0_i32_1 = arith.constant 0 : i32
    return %c0_i32, %c0_i32_0 : i32, i32
  }
  func.func @transform_2(%arg0: i32, %arg1: i32) -> (i32, i32) {
    %c0_i32 = arith.constant 0 : i32
    %c0_i32_0 = arith.constant 0 : i32
    %c0_i32_1 = arith.constant 0 : i32
    return %c0_i32, %c0_i32_0 : i32, i32
  }
  func.func @transform_3(%arg0: i32, %arg1: i32) -> (i32, i32) {
    %c0_i32 = arith.constant 0 : i32
    %c0_i32_0 = arith.constant 0 : i32
    %c0_i32_1 = arith.constant 0 : i32
    return %c0_i32, %c0_i32_0 : i32, i32
  }
  func.func @transform_4(%arg0: i32, %arg1: i32) -> (i32, i32) {
    %c0_i32 = arith.constant 0 : i32
    %c0_i32_0 = arith.constant 0 : i32
    %c0_i32_1 = arith.constant 0 : i32
    return %c0_i32, %c0_i32_0 : i32, i32
  }
  func.func @transform_5(%arg0: i32, %arg1: i32) -> (i32, i32) {
    %c0_i32 = arith.constant 0 : i32
    %c0_i32_0 = arith.constant 0 : i32
    %c0_i32_1 = arith.constant 0 : i32
    return %c0_i32, %c0_i32_0 : i32, i32
  }
  func.func @transform_6(%arg0: i32, %arg1: i32) -> (i32, i32, i32) {
    %c0_i32 = arith.constant 0 : i32
    %c0_i32_0 = arith.constant 0 : i32
    %c0_i32_1 = arith.constant 0 : i32
    return %arg0, %c0_i32, %c0_i32_0 : i32, i32, i32
  }
  func.func @transform_7(%arg0: i32, %arg1: i32) -> (i32, i32, i32) {
    %c0_i32 = arith.constant 0 : i32
    %c0_i32_0 = arith.constant 0 : i32
    %c0_i32_1 = arith.constant 0 : i32
    return %arg0, %c0_i32, %c0_i32_0 : i32, i32, i32
  }
}

</mosaic_0001>

<llo_original>
// kernel: tpu_custom_call.1
$region0: #{tpu_custom_call.1}
  #allocation0 [shape = 'u32[]', space=smem, size = 0x4, offset = 0x4, fixed_abs, tag = 'smem constant byte address 0x4 - core index']
  #allocation1 [shape = 'u32[144,128]{1,0:T(1,128)}', space=vmem, size = 0x12000, scoped, tag = 'internal scratch']
  #allocation2 [shape = 'f32[1,16]{1,0:T(1,128)}', space=vmem, size = 0x200, scoped, tag = 'scratch operand']
  #allocation3 [shape = 'f32[1,16]{1,0:T(1,128)}', space=vmem, size = 0x200, scoped, tag = 'scratch operand']
  %s0 = inlined_call_operand.hbm [shape: f32[2,16,256], index: 0, kind: input, shape index: {}]
  %s1 = inlined_call_operand.hbm [shape: f32[16,128], index: 1, kind: input, shape index: {}]
  %s2 = inlined_call_operand.hbm [shape: f32[16,128], index: 2, kind: input, shape index: {}]
  %s3 = inlined_call_operand.vmem [shape: f32[1,128], index: 3, kind: input, shape index: {}]
  %s4 = inlined_call_operand.hbm [shape: f32[128,128], index: 4, kind: input, shape index: {}]
  %s5 = inlined_call_operand.vmem [shape: f32[1,128], index: 5, kind: input, shape index: {}]
  %s6 = inlined_call_operand.hbm [shape: f32[2,1,128], index: 6, kind: output, shape index: {0}]
  %s7 = inlined_call_operand.hbm [shape: f32[2,1,128], index: 7, kind: output, shape index: {1}]
  %8 = xla_tuple %s6, %s7
  %s9 = sld [smem:[#allocation0]]
  $region89: #{tpu_custom_call.1} parent=0
    _
  %s11 = ssub.s32 1, %s9
  %s12 = scalar_select 0, %s11, %s9
  $region1: #{tpu_custom_call.1} parent=0
    #allocation4 [shape = 'u8[16384]{0}', space=vmem, size = 0x4000, scoped, tag = 'input window, operand 0']
    #allocation5 [shape = 's32[2]{0}', space=sflag, size = 0x8, scoped, tag = 'scoped memory for tpu_custom_call.1']
    #allocation6 [shape = 's32[2]{0}', space=sflag, size = 0x8, scoped, tag = 'scoped memory for tpu_custom_call.1']
    #allocation7 [shape = 'u8[8192]{0}', space=vmem, size = 0x2000, scoped, tag = 'input window, operand 1, single buffered']
    #allocation8 [shape = 's32[1]{0}', space=sflag, size = 0x4, scoped, tag = 'scoped memory for tpu_custom_call.1']
    #allocation9 [shape = 'u8[8192]{0}', space=vmem, size = 0x2000, scoped, tag = 'input window, operand 2, single buffered']
    #allocation10 [shape = 'u8[65536]{0}', space=vmem, size = 0x10000, scoped, tag = 'input window, operand 4, single buffered']
    #allocation11 [shape = 's32[1]{0}', space=sflag, size = 0x4, scoped, tag = 'scoped memory for tpu_custom_call.1']
    #allocation12 [shape = 'u8[1024]{0}', space=vmem, size = 0x400, scoped, tag = 'output window, operand 0']
    #allocation13 [shape = 'u8[1024]{0}', space=vmem, size = 0x400, scoped, tag = 'output window, operand 1']
    #allocation14 [shape = 's32[2]{0}', space=sflag, size = 0x8, scoped, tag = 'scoped memory for tpu_custom_call.1']
    %13 = vsyncpa [#allocation5], 0
    %s14 = scalar_lea.sflag [#allocation5], 1
    %15 = vsyncpa %s14, 0
    %16 = vsyncpa [#allocation8], 0
    %17 = vsyncpa [#allocation11], 0
    %18 = vsyncpa [#allocation6], 0
    %s19 = scalar_lea.sflag [#allocation6], 1
    %20 = vsyncpa %s19, 0
    %21 = vsyncpa [#allocation14], 0
    %s22 = scalar_lea.sflag [#allocation14], 1
    %23 = vsyncpa %s22, 0
    loop: start=0, step=1, limit=6
    $region2: #{tpu_custom_call.1} parent=1 // loop_pre_header
      _
    $region3: #{tpu_custom_call.1} parent=1 // loop_header
      %s25 = sphi 0, %s29
      %p26 = scmp.ge.s32.totalorder %s25, 6
      %s32 = sphi 0, %s44
      %s33 = sphi 0, %s40
      %s34 = sphi 0, %s32
      %s35 = sphi 0, %s33
      %s36 = sphi 0, %s34
      %s37 = sphi 0, %s35
      %s49 = sphi 0, %s51
      %s52 = sphi 0, %s49
      %s53 = sphi 0, %s52
      %s69 = sphi 0, %s53
      %s73 = sphi 0, %s73
      %s75 = sphi 0, %s73
      %s76 = sphi 0, %s75
      %s90 = sphi 0, %s76
      %s94 = sphi 0, %s94
      %s96 = sphi 0, %s94
      %s97 = sphi 0, %s96
      %s111 = sphi 0, %s97
      %s115 = sphi 0, %s115
      %s117 = sphi 0, %s115
      %s118 = sphi 0, %s117
      %s132 = sphi 0, %s118
      %s136 = sphi 0, %s136
      %s138 = sphi 0, %s136
      %s139 = sphi 0, %s138
      %s153 = sphi 0, %s139
      %s157 = sphi 0, %s157
      %s159 = sphi 0, %s157
      %s160 = sphi 0, %s159
      %s174 = sphi 0, %s160
      %s180 = sphi 0, %s182
      %s183 = sphi 0, %s180
      %s184 = sphi 0, %s183
      %s200 = sphi 0, %s184
      %s206 = sphi 0, %s208
      %s209 = sphi 0, %s206
      %s210 = sphi 0, %s209
      %s226 = sphi 0, %s210
    $region4: #{tpu_custom_call.1} parent=1 // loop_header_branch
      %28 = sbr.rel (%p26) target = $region8
    $region5: #{tpu_custom_call.1} parent=1 // loop_body
      %s30 = ssub.s32 %s25, 1
      %s31 = ssub.s32 %s25, 2
      %s38 = sadd.s32 1, %s33
      %p39 = scmp.ge.s32.totalorder %s38, 2
      %s40 = scalar_select %p39, 0, %s38
      %s41 = sadd.s32 1, %s32
      %s42 = scalar_select %p39, %s41, %s32
      %p43 = scmp.ge.s32.totalorder %s42, 2
      %s44 = scalar_select %p43, 0, %s42
      %s45 = ssub.s32 %s32, %s44
      %s46 = ssub.s32 %s33, %s40
      %s47 = sor.u32 %s45, %s46
      %p48 = scmp.eq.s32.totalorder %s47, 0
      %s50 = sadd.s32 %s49, 1
      %s51 = scalar_select %p48, %s49, %s50
      %p54 = pneg %p48
      %p55 = scmp.eq.s32.totalorder %s25, 3
      %p56 = por %p54, %p55
      %p57 = scmp.ne.s32.totalorder %s49, %s52
      %p58 = scmp.eq.s32.totalorder %s25, 0
      %p59 = por %p57, %p58
      %p60 = scmp.ne.s32.totalorder %s49, %s52
      %p61 = scmp.eq.s32.totalorder %s30, 3
      %p62 = por %p60, %p61
      %p63 = scmp.ne.s32.totalorder %s52, %s53
      %p64 = scmp.eq.s32.totalorder %s30, 0
      %p65 = por %p63, %p64
      %p66 = scmp.ne.s32.totalorder %s52, %s53
      %p67 = scmp.eq.s32.totalorder %s31, 3
      %p68 = por %p66, %p67
      %p70 = scmp.ne.s32.totalorder %s53, %s69
      %p71 = scmp.eq.s32.totalorder %s31, 0
      %p72 = por %p70, %p71
      %s74 = sadd.s32 %s73, 1
      %p77 = scmp.eq.s32.totalorder %s25, 3
      %p78 = scmp.ne.s32.totalorder %s73, %s75
      %p79 = scmp.eq.s32.totalorder %s25, 0
      %p80 = por %p78, %p79
      %p81 = scmp.ne.s32.totalorder %s73, %s75
      %p82 = scmp.eq.s32.totalorder %s30, 3
      %p83 = por %p81, %p82
      %p84 = scmp.ne.s32.totalorder %s75, %s76
      %p85 = scmp.eq.s32.totalorder %s30, 0
      %p86 = por %p84, %p85
      %p87 = scmp.ne.s32.totalorder %s75, %s76
      %p88 = scmp.eq.s32.totalorder %s31, 3
      %p89 = por %p87, %p88
      %p91 = scmp.ne.s32.totalorder %s76, %s90
      %p92 = scmp.eq.s32.totalorder %s31, 0
      %p93 = por %p91, %p92
      %s95 = sadd.s32 %s94, 1
      %p98 = scmp.eq.s32.totalorder %s25, 3
      %p99 = scmp.ne.s32.totalorder %s94, %s96
      %p100 = scmp.eq.s32.totalorder %s25, 0
      %p101 = por %p99, %p100
      %p102 = scmp.ne.s32.totalorder %s94, %s96
      %p103 = scmp.eq.s32.totalorder %s30, 3
      %p104 = por %p102, %p103
      %p105 = scmp.ne.s32.totalorder %s96, %s97
      %p106 = scmp.eq.s32.totalorder %s30, 0
      %p107 = por %p105, %p106
      %p108 = scmp.ne.s32.totalorder %s96, %s97
      %p109 = scmp.eq.s32.totalorder %s31, 3
      %p110 = por %p108, %p109
      %p112 = scmp.ne.s32.totalorder %s97, %s111
      %p113 = scmp.eq.s32.totalorder %s31, 0
      %p114 = por %p112, %p113
      %s116 = sadd.s32 %s115, 1
      %p119 = scmp.eq.s32.totalorder %s25, 3
      %p120 = scmp.ne.s32.totalorder %s115, %s117
      %p121 = scmp.eq.s32.totalorder %s25, 0
      %p122 = por %p120, %p121
      %p123 = scmp.ne.s32.totalorder %s115, %s117
      %p124 = scmp.eq.s32.totalorder %s30, 3
      %p125 = por %p123, %p124
      %p126 = scmp.ne.s32.totalorder %s117, %s118
      %p127 = scmp.eq.s32.totalorder %s30, 0
      %p128 = por %p126, %p127
      %p129 = scmp.ne.s32.totalorder %s117, %s118
      %p130 = scmp.eq.s32.totalorder %s31, 3
      %p131 = por %p129, %p130
      %p133 = scmp.ne.s32.totalorder %s118, %s132
      %p134 = scmp.eq.s32.totalorder %s31, 0
      %p135 = por %p133, %p134
      %s137 = sadd.s32 %s136, 1
      %p140 = scmp.eq.s32.totalorder %s25, 3
      %p141 = scmp.ne.s32.totalorder %s136, %s138
      %p142 = scmp.eq.s32.totalorder %s25, 0
      %p143 = por %p141, %p142
      %p144 = scmp.ne.s32.totalorder %s136, %s138
      %p145 = scmp.eq.s32.totalorder %s30, 3
      %p146 = por %p144, %p145
      %p147 = scmp.ne.s32.totalorder %s138, %s139
      %p148 = scmp.eq.s32.totalorder %s30, 0
      %p149 = por %p147, %p148
      %p150 = scmp.ne.s32.totalorder %s138, %s139
      %p151 = scmp.eq.s32.totalorder %s31, 3
      %p152 = por %p150, %p151
      %p154 = scmp.ne.s32.totalorder %s139, %s153
      %p155 = scmp.eq.s32.totalorder %s31, 0
      %p156 = por %p154, %p155
      %s158 = sadd.s32 %s157, 1
      %p161 = scmp.eq.s32.totalorder %s25, 3
      %p162 = scmp.ne.s32.totalorder %s157, %s159
      %p163 = scmp.eq.s32.totalorder %s25, 0
      %p164 = por %p162, %p163
      %p165 = scmp.ne.s32.totalorder %s157, %s159
      %p166 = scmp.eq.s32.totalorder %s30, 3
      %p167 = por %p165, %p166
      %p168 = scmp.ne.s32.totalorder %s159, %s160
      %p169 = scmp.eq.s32.totalorder %s30, 0
      %p170 = por %p168, %p169
      %p171 = scmp.ne.s32.totalorder %s159, %s160
      %p172 = scmp.eq.s32.totalorder %s31, 3
      %p173 = por %p171, %p172
      %p175 = scmp.ne.s32.totalorder %s160, %s174
      %p176 = scmp.eq.s32.totalorder %s31, 0
      %p177 = por %p175, %p176
      %s178 = ssub.s32 %s32, %s44
      %p179 = scmp.eq.s32.totalorder %s178, 0
      %s181 = sadd.s32 %s180, 1
      %s182 = scalar_select %p179, %s180, %s181
      %p185 = pneg %p179
      %p186 = scmp.eq.s32.totalorder %s25, 3
      %p187 = por %p185, %p186
      %p188 = scmp.ne.s32.totalorder %s180, %s183
      %p189 = scmp.eq.s32.totalorder %s25, 0
      %p190 = por %p188, %p189
      %p191 = scmp.ne.s32.totalorder %s180, %s183
      %p192 = scmp.eq.s32.totalorder %s30, 3
      %p193 = por %p191, %p192
      %p194 = scmp.ne.s32.totalorder %s183, %s184
      %p195 = scmp.eq.s32.totalorder %s30, 0
      %p196 = por %p194, %p195
      %p197 = scmp.ne.s32.totalorder %s183, %s184
      %p198 = scmp.eq.s32.totalorder %s31, 3
      %p199 = por %p197, %p198
      %p201 = scmp.ne.s32.totalorder %s184, %s200
      %p202 = scmp.eq.s32.totalorder %s31, 0
      %p203 = por %p201, %p202
      %s204 = ssub.s32 %s32, %s44
      %p205 = scmp.eq.s32.totalorder %s204, 0
      %s207 = sadd.s32 %s206, 1
      %s208 = scalar_select %p205, %s206, %s207
      %p211 = pneg %p205
      %p212 = scmp.eq.s32.totalorder %s25, 3
      %p213 = por %p211, %p212
      %p214 = scmp.ne.s32.totalorder %s206, %s209
      %p215 = scmp.eq.s32.totalorder %s25, 0
      %p216 = por %p214, %p215
      %p217 = scmp.ne.s32.totalorder %s206, %s209
      %p218 = scmp.eq.s32.totalorder %s30, 3
      %p219 = por %p217, %p218
      %p220 = scmp.ne.s32.totalorder %s209, %s210
      %p221 = scmp.eq.s32.totalorder %s30, 0
      %p222 = por %p220, %p221
      %p223 = scmp.ne.s32.totalorder %s209, %s210
      %p224 = scmp.eq.s32.totalorder %s31, 3
      %p225 = por %p223, %p224
      %p227 = scmp.ne.s32.totalorder %s210, %s226
      %p228 = scmp.eq.s32.totalorder %s31, 0
      %p229 = por %p227, %p228
      %p230 = scmp.le.s32.totalorder 1, %s25
      %p231 = scmp.lt.s32.totalorder %s25, 5
      %p232 = pnand %p230, %p231
      %p233 = pneg %p232
      // Predicated region
      $region9: #{tpu_custom_call.1} parent=5 // pred_check
        _
      $region10: #{tpu_custom_call.1} parent=5 // pred_check_branch
        %235 = sbr.rel (%p232) target = $region12
      $region11: #{tpu_custom_call.1} parent=5 // pred_region
        %s236 = ssub.s32 %s25, 1
        // Predicated region
        $region13: #{tpu_custom_call.1} parent=11 // pred_check
          %p237 = pneg %p86
        $region14: #{tpu_custom_call.1} parent=11 // pred_check_branch
          %239 = sbr.rel (%p237) target = $region16
        $region15: #{tpu_custom_call.1} parent=11 // pred_region
          %s241 = ssub.s32 256, 256
          %242 = vsyncadd [#allocation8], %s241
          %s243 = sshll.u32 [#allocation7], 4
          %s244 = int_to_ptr.vmem [resolvable:$true] %s243
          %249 = dma.hbm_to_vmem [thread:$0]  %s1, 256, %s244, [#allocation8], 128, 128, 8
        $region16: #{tpu_custom_call.1} parent=11 // pred_fallthru
          _
        // Predicated region
        $region17: #{tpu_custom_call.1} parent=11 // pred_check
          %p250 = pneg %p107
        $region18: #{tpu_custom_call.1} parent=11 // pred_check_branch
          %252 = sbr.rel (%p250) target = $region20
        $region19: #{tpu_custom_call.1} parent=11 // pred_region
          %s254 = ssub.s32 256, 256
          %255 = vsyncadd [#allocation8], %s254
          %s256 = sshll.u32 [#allocation9], 4
          %s257 = int_to_ptr.vmem [resolvable:$true] %s256
          %262 = dma.hbm_to_vmem [thread:$0]  %s2, 256, %s257, [#allocation8], 128, 128, 8
        $region20: #{tpu_custom_call.1} parent=11 // pred_fallthru
          _
        // Predicated region
        $region21: #{tpu_custom_call.1} parent=11 // pred_check
          %p263 = pneg %p128
        $region22: #{tpu_custom_call.1} parent=11 // pred_check_branch
          %265 = sbr.rel (%p263) target = $region24
        $region23: #{tpu_custom_call.1} parent=11 // pred_region
          _
        $region24: #{tpu_custom_call.1} parent=11 // pred_fallthru
          _
        // Predicated region
        $region25: #{tpu_custom_call.1} parent=11 // pred_check
          %p266 = pneg %p149
        $region26: #{tpu_custom_call.1} parent=11 // pred_check_branch
          %268 = sbr.rel (%p266) target = $region28
        $region27: #{tpu_custom_call.1} parent=11 // pred_region
          %s270 = ssub.s32 2048, 2048
          %271 = vsyncadd [#allocation11], %s270
          %s272 = sshll.u32 [#allocation10], 4
          %s273 = int_to_ptr.vmem [resolvable:$true] %s272
          %278 = dma.hbm_to_vmem [thread:$0]  %s4, 2048, %s273, [#allocation11], 128, 128, 8
        $region28: #{tpu_custom_call.1} parent=11 // pred_fallthru
          _
        // Predicated region
        $region29: #{tpu_custom_call.1} parent=11 // pred_check
          %p279 = pneg %p170
        $region30: #{tpu_custom_call.1} parent=11 // pred_check_branch
          %281 = sbr.rel (%p279) target = $region32
        $region31: #{tpu_custom_call.1} parent=11 // pred_region
          _
        $region32: #{tpu_custom_call.1} parent=11 // pred_fallthru
          _
      $region12: #{tpu_custom_call.1} parent=5 // pred_fallthru
        _
      %p282 = scmp.lt.s32.totalorder %s25, 4
      // Predicated region
      $region33: #{tpu_custom_call.1} parent=5 // pred_check
        %p283 = pneg %p282
      $region34: #{tpu_custom_call.1} parent=5 // pred_check_branch
        %285 = sbr.rel (%p283) target = $region36
      $region35: #{tpu_custom_call.1} parent=5 // pred_region
        // Predicated region
        $region37: #{tpu_custom_call.1} parent=35 // pred_check
          %p286 = pneg %p59
        $region38: #{tpu_custom_call.1} parent=35 // pred_check_branch
          %288 = sbr.rel (%p286) target = $region40
        $region39: #{tpu_custom_call.1} parent=35 // pred_region
          %s289 = sand.u32 %s49, 1
          %s290 = scalar_lea.sflag [#allocation5], %s289
          %s291 = sand.u32 %s49, 1
          %s292 = smul.addr %s291, 16
          %s293 = scalar_lea.vmem [#allocation4], %s292
          %s295 = ssub.s32 256, 256
          %296 = vsyncadd %s290, %s295
          %s297 = smul.addr %s32, 4
          %s298 = sadd.s32 %s33, %s297
          %s299 = smul.addr %s298, 128
          %s300 = scalar_lea.hbm %s0, %s299
          %s301 = sshll.u32 %s293, 4
          %s302 = int_to_ptr.vmem [resolvable:$true] %s301
          %307 = dma.hbm_to_vmem [thread:$0]  %s300, 256, %s302, %s290, 256, 128, 8
        $region40: #{tpu_custom_call.1} parent=35 // pred_fallthru
          _
      $region36: #{tpu_custom_call.1} parent=5 // pred_fallthru
        _
      %p308 = scmp.le.s32.totalorder 1, %s25
      %p309 = scmp.lt.s32.totalorder %s25, 5
      %p310 = pnand %p308, %p309
      %p311 = pneg %p310
      // Predicated region
      $region41: #{tpu_custom_call.1} parent=5 // pred_check
        _
      $region42: #{tpu_custom_call.1} parent=5 // pred_check_branch
        %313 = sbr.rel (%p310) target = $region44
      $region43: #{tpu_custom_call.1} parent=5 // pred_region
        %s314 = ssub.s32 %s25, 1
        %s315 = sand.u32 %s52, 1
        %s316 = scalar_lea.sflag [#allocation5], %s315
        %s317 = sand.u32 %s52, 1
        %s318 = smul.addr %s317, 16
        %s319 = scalar_lea.vmem [#allocation4], %s318
        // Predicated region
        $region45: #{tpu_custom_call.1} parent=43 // pred_check
          %p320 = pneg %p65
        $region46: #{tpu_custom_call.1} parent=43 // pred_check_branch
          %322 = sbr.rel (%p320) target = $region48
        $region47: #{tpu_custom_call.1} parent=43 // pred_region
          %323 = dma.done %s316, 256
        $region48: #{tpu_custom_call.1} parent=43 // pred_fallthru
          _
        // Predicated region
        $region49: #{tpu_custom_call.1} parent=43 // pred_check
          %p324 = pneg %p86
        $region50: #{tpu_custom_call.1} parent=43 // pred_check_branch
          %326 = sbr.rel (%p324) target = $region52
        $region51: #{tpu_custom_call.1} parent=43 // pred_region
          %327 = dma.done [#allocation8], 256
        $region52: #{tpu_custom_call.1} parent=43 // pred_fallthru
          _
        // Predicated region
        $region53: #{tpu_custom_call.1} parent=43 // pred_check
          %p328 = pneg %p107
        $region54: #{tpu_custom_call.1} parent=43 // pred_check_branch
          %330 = sbr.rel (%p328) target = $region56
        $region55: #{tpu_custom_call.1} parent=43 // pred_region
          %331 = dma.done [#allocation8], 256
        $region56: #{tpu_custom_call.1} parent=43 // pred_fallthru
          _
        // Predicated region
        $region57: #{tpu_custom_call.1} parent=43 // pred_check
          %p332 = pneg %p149
        $region58: #{tpu_custom_call.1} parent=43 // pred_check_branch
          %334 = sbr.rel (%p332) target = $region60
        $region59: #{tpu_custom_call.1} parent=43 // pred_region
          %335 = dma.done [#allocation11], 2048
        $region60: #{tpu_custom_call.1} parent=43 // pred_fallthru
          _
        %s336 = sand.u32 %s52, 1
        %s337 = scalar_lea.sflag [#allocation5], %s336
        %s338 = sand.u32 %s52, 1
        %s339 = smul.addr %s338, 16
        %s340 = scalar_lea.vmem [#allocation4], %s339
        %p341 = pneg %p65
        %p342 = pneg %p62
        %p343 = pneg %p86
        %p344 = pneg %p83
        %p345 = pneg %p107
        %p346 = pneg %p104
        %p347 = pneg %p128
        %p348 = pneg %p125
        %p349 = pneg %p149
        %p350 = pneg %p146
        %p351 = pneg %p170
        %p352 = pneg %p167
        %p353 = pneg %p196
        %p354 = pneg %p193
        %s355 = sand.u32 %s183, 1
        %s356 = scalar_lea.sflag [#allocation6], %s355
        %s357 = sand.u32 %s183, 1
        %s358 = scalar_lea.vmem [#allocation12], %s357
        %p359 = pneg %p222
        %p360 = pneg %p219
        %s361 = sand.u32 %s209, 1
        %s362 = scalar_lea.sflag [#allocation14], %s361
        %s363 = sand.u32 %s209, 1
        %s364 = scalar_lea.vmem [#allocation13], %s363
        %p365 = scmp.eq.s32.totalorder %s35, 0
        // Predicated region
        $region61: #{tpu_custom_call.1} parent=43 // pred_check
          %p366 = pneg %p365
        $region62: #{tpu_custom_call.1} parent=43 // pred_check_branch
          %368 = sbr.rel (%p366) target = $region64
        $region63: #{tpu_custom_call.1} parent=43 // pred_region
          %vm369 = vcmask 122880
          %370 = vst.msk [vmem:[#allocation2] sm:$0x1] %vm369, 0.0
          %371 = vst.msk [vmem:[#allocation3] sm:$0x1] %vm369, 0.0
        $region64: #{tpu_custom_call.1} parent=43 // pred_fallthru
          _
        %v372 = vld [vmem:[%s319] sm:$0xff]
        %v373 = vld [vmem:[%s319 + $0x8] sm:$0xff]
        %374 = vadd.xlane.f32.xlu0 %v372
        %v375 = vpop.xlane.xlu0 %374
        %376 = vadd.xlane.f32.xlu0 %v373
        %v377 = vpop.xlane.xlu0 %376
        %v378 = vmul.f32 %v372, %v372
        %v379 = vmul.f32 %v373, %v373
        %380 = vadd.xlane.f32.xlu0 %v378
        %v381 = vpop.xlane.xlu0 %380
        %382 = vadd.xlane.f32.xlu0 %v379
        %v383 = vpop.xlane.xlu0 %382
        %s384 = smul.u32 %s35, 128
        %s385 = scvt.s32.f32 %s384
        %s386 = sadd.f32 %s385, 128.0
        %v387 = vmul.f32 %v375, 0.0078125
        %v388 = vmul.f32 %v377, 0.0078125
        %v389 = vmul.f32 %v375, %v387
        %v390 = vmul.f32 %v377, %v388
        %v391 = vsub.f32 %v381, %v389
        %v392 = vsub.f32 %v383, %v390
        %v393 = vld [vmem:[#allocation2] sm:$0x1]
        %v395 = vlaneseq
        %v396 = vshrl.u32 %v395, 7
        %v397 = vsub.s32 0, %v396
        %v398 = vrot.slane %v393, %v397
        %400 = vbcast.lane.b32.xlu0 %v398, 256
        %v401 = vpop.permute.xlu0 %400
        %s403 = sor.u32 256, 8
        %404 = vbcast.lane.b32.xlu0 %v398, %s403
        %v405 = vpop.permute.xlu0 %404
        %v408 = vsub.f32 %v387, %v401
        %v409 = vsub.f32 %v388, %v405
        %v410 = vstv %s386
        %v411 = vrcp.pop %v410
        %s412 = vtos %v411
        %s413 = smul.f32 128.0, %s412
        %v414 = vstv %s413
        %v415 = vmul.f32 %v408, %v414
        %v416 = vmul.f32 %v409, %v414
        %v419 = vcombine.high %v415, %v415
        %v421 = vunpack.c.l.s4 1966171168
        %v422 = vunpack.c.0.s8 %v421
        %v423 = vlaneseq
        %v424 = vshrl.u32 %v423, 7
        %v425 = vsub.s32 %v422, %v424
        %v426 = vrot.slane %v415, %v425
        %v428 = vunpack.c.l.s4 1966171168
        %v429 = vunpack.c.0.s8 %v428
        %v430 = vlaneseq
        %v431 = vshrl.u32 %v430, 7
        %v432 = vsub.s32 %v429, %v431
        %v433 = vrot.slane %v419, %v432
        %v434 = vcombine.high %v426, %v426
        %v435 = vcombine.high %v433, %v433
        %v437 = vunpack.c.l.s4 1966171168
        %v438 = vunpack.c.0.s8 %v437
        %v439 = vlaneseq
        %v440 = vshrl.u32 %v439, 7
        %v441 = vsub.s32 %v438, %v440
        %v442 = vrot.slane %v426, %v441
        %v444 = vunpack.c.l.s4 1966171168
        %v445 = vunpack.c.0.s8 %v444
        %v446 = vlaneseq
        %v447 = vshrl.u32 %v446, 7
        %v448 = vsub.s32 %v445, %v447
        %v449 = vrot.slane %v433, %v448
        %v451 = vunpack.c.l.s4 1966171168
        %v452 = vunpack.c.0.s8 %v451
        %v453 = vlaneseq
        %v454 = vshrl.u32 %v453, 7
        %v455 = vsub.s32 %v452, %v454
        %v456 = vrot.slane %v434, %v455
        %v458 = vunpack.c.l.s4 1966171168
        %v459 = vunpack.c.0.s8 %v458
        %v460 = vlaneseq
        %v461 = vshrl.u32 %v460, 7
        %v462 = vsub.s32 %v459, %v461
        %v463 = vrot.slane %v435, %v462
        %v464 = vcombine.high %v442, %v442
        %v465 = vcombine.high %v449, %v449
        %v466 = vcombine.high %v456, %v456
        %v467 = vcombine.high %v463, %v463
        %v468 = vcombine.high %v416, %v416
        %v470 = vunpack.c.l.s4 1966171168
        %v471 = vunpack.c.0.s8 %v470
        %v472 = vlaneseq
        %v473 = vshrl.u32 %v472, 7
        %v474 = vsub.s32 %v471, %v473
        %v475 = vrot.slane %v416, %v474
        %v477 = vunpack.c.l.s4 1966171168
        %v478 = vunpack.c.0.s8 %v477
        %v479 = vlaneseq
        %v480 = vshrl.u32 %v479, 7
        %v481 = vsub.s32 %v478, %v480
        %v482 = vrot.slane %v468, %v481
        %v483 = vcombine.high %v475, %v475
        %v484 = vcombine.high %v482, %v482
        %v486 = vunpack.c.l.s4 1966171168
        %v487 = vunpack.c.0.s8 %v486
        %v488 = vlaneseq
        %v489 = vshrl.u32 %v488, 7
        %v490 = vsub.s32 %v487, %v489
        %v491 = vrot.slane %v475, %v490
        %v493 = vunpack.c.l.s4 1966171168
        %v494 = vunpack.c.0.s8 %v493
        %v495 = vlaneseq
        %v496 = vshrl.u32 %v495, 7
        %v497 = vsub.s32 %v494, %v496
        %v498 = vrot.slane %v482, %v497
        %v500 = vunpack.c.l.s4 1966171168
        %v501 = vunpack.c.0.s8 %v500
        %v502 = vlaneseq
        %v503 = vshrl.u32 %v502, 7
        %v504 = vsub.s32 %v501, %v503
        %v505 = vrot.slane %v483, %v504
        %v507 = vunpack.c.l.s4 1966171168
        %v508 = vunpack.c.0.s8 %v507
        %v509 = vlaneseq
        %v510 = vshrl.u32 %v509, 7
        %v511 = vsub.s32 %v508, %v510
        %v512 = vrot.slane %v484, %v511
        %v513 = vcombine.high %v491, %v491
        %v514 = vcombine.high %v498, %v498
        %v515 = vcombine.high %v505, %v505
        %v516 = vcombine.high %v512, %v512
        %v517 = vcombine.low %v442, %v456
        %v518 = vcombine.low %v464, %v466
        %v519 = vcombine.low %v449, %v463
        %v520 = vcombine.low %v465, %v467
        %v522 = vunpack.c.l.s4 1966171168
        %v523 = vunpack.c.0.s8 %v522
        %v524 = vlaneseq
        %v525 = vshrl.u32 %v524, 7
        %v526 = vsub.s32 %v523, %v525
        %v527 = vrot.slane %v517, %v526
        %v529 = vunpack.c.l.s4 1966171168
        %v530 = vunpack.c.0.s8 %v529
        %v531 = vlaneseq
        %v532 = vshrl.u32 %v531, 7
        %v533 = vsub.s32 %v530, %v532
        %v534 = vrot.slane %v518, %v533
        %v536 = vunpack.c.l.s4 1966171168
        %v537 = vunpack.c.0.s8 %v536
        %v538 = vlaneseq
        %v539 = vshrl.u32 %v538, 7
        %v540 = vsub.s32 %v537, %v539
        %v541 = vrot.slane %v519, %v540
        %v543 = vunpack.c.l.s4 1966171168
        %v544 = vunpack.c.0.s8 %v543
        %v545 = vlaneseq
        %v546 = vshrl.u32 %v545, 7
        %v547 = vsub.s32 %v544, %v546
        %v548 = vrot.slane %v520, %v547
        %v549 = vcombine.low %v527, %v534
        %v550 = vcombine.low %v541, %v548
        %v552 = vunpack.c.l.s4 1966171168
        %v553 = vunpack.c.0.s8 %v552
        %v554 = vlaneseq
        %v555 = vshrl.u32 %v554, 7
        %v556 = vsub.s32 %v553, %v555
        %v557 = vrot.slane %v549, %v556
        %v559 = vunpack.c.l.s4 1966171168
        %v560 = vunpack.c.0.s8 %v559
        %v561 = vlaneseq
        %v562 = vshrl.u32 %v561, 7
        %v563 = vsub.s32 %v560, %v562
        %v564 = vrot.slane %v550, %v563
        %v565 = vcombine.low %v557, %v564
        %v566 = vcombine.low %v491, %v505
        %v567 = vcombine.low %v513, %v515
        %v568 = vcombine.low %v498, %v512
        %v569 = vcombine.low %v514, %v516
        %v571 = vunpack.c.l.s4 1966171168
        %v572 = vunpack.c.0.s8 %v571
        %v573 = vlaneseq
        %v574 = vshrl.u32 %v573, 7
        %v575 = vsub.s32 %v572, %v574
        %v576 = vrot.slane %v566, %v575
        %v578 = vunpack.c.l.s4 1966171168
        %v579 = vunpack.c.0.s8 %v578
        %v580 = vlaneseq
        %v581 = vshrl.u32 %v580, 7
        %v582 = vsub.s32 %v579, %v581
        %v583 = vrot.slane %v567, %v582
        %v585 = vunpack.c.l.s4 1966171168
        %v586 = vunpack.c.0.s8 %v585
        %v587 = vlaneseq
        %v588 = vshrl.u32 %v587, 7
        %v589 = vsub.s32 %v586, %v588
        %v590 = vrot.slane %v568, %v589
        %v592 = vunpack.c.l.s4 1966171168
        %v593 = vunpack.c.0.s8 %v592
        %v594 = vlaneseq
        %v595 = vshrl.u32 %v594, 7
        %v596 = vsub.s32 %v593, %v595
        %v597 = vrot.slane %v569, %v596
        %v598 = vcombine.low %v576, %v583
        %v599 = vcombine.low %v590, %v597
        %v601 = vunpack.c.l.s4 1966171168
        %v602 = vunpack.c.0.s8 %v601
        %v603 = vlaneseq
        %v604 = vshrl.u32 %v603, 7
        %v605 = vsub.s32 %v602, %v604
        %v606 = vrot.slane %v598, %v605
        %v608 = vunpack.c.l.s4 1966171168
        %v609 = vunpack.c.0.s8 %v608
        %v610 = vlaneseq
        %v611 = vshrl.u32 %v610, 7
        %v612 = vsub.s32 %v609, %v611
        %v613 = vrot.slane %v599, %v612
        %v614 = vcombine.low %v606, %v613
        %615 = vset.pattern.permute.xlu0 0
        %616 = vperm.xlu0 %615, %v565
        %v617 = vpop.permute.xlu0 %616
        %618 = vset.pattern.permute.xlu0 0
        %619 = vperm.xlu0 %618, %v614
        %v620 = vpop.permute.xlu0 %619
        %v621 = vlaneseq
        %v622 = vand.u32 %v621, 127
        %v623 = vlaneseq
        %v624 = vshrl.u32 %v623, 7
        %v625 = vsub.s32 %v622, %v624
        %v626 = vrot.slane %v617, %v625
        %v627 = vadd.s32 %v622, 4294967288
        %v628 = vlaneseq
        %v629 = vshrl.u32 %v628, 7
        %v630 = vsub.s32 %v627, %v629
        %v631 = vrot.slane %v620, %v630
        %vm632 = vcmask 130112
        %v633 = vsel %vm632, %v631, %v626
        %v635 = vunpack.c.l.s4 1966171168
        %v636 = vunpack.c.0.s8 %v635
        %v637 = vlaneseq
        %v638 = vshrl.u32 %v637, 7
        %v639 = vsub.s32 %v636, %v638
        %v640 = vrot.slane %v633, %v639
        %v642 = vunpack.c.l.s4 1966171168
        %v643 = vunpack.c.0.s8 %v642
        %v644 = vlaneseq
        %v645 = vshrl.u32 %v644, 7
        %v646 = vsub.s32 %v643, %v645
        %v647 = vrot.slane %v640, %v646
        %v649 = vadd.f32 %v393, %v647
        %vm650 = vcmask 122880
        %651 = vst.msk [vmem:[#allocation2] sm:$0x1] %vm650, %v649
        %v652 = vld [vmem:[#allocation3] sm:$0x1]
        %v653 = vmul.f32 %v408, %v408
        %v654 = vmul.f32 %v409, %v409
        %s655 = smul.f32 %s385, 128.0
        %v656 = vstv %s386
        %v657 = vrcp.pop %v656
        %s658 = vtos %v657
        %s659 = smul.f32 %s655, %s658
        %v660 = vstv %s659
        %v661 = vmul.f32 %v653, %v660
        %v662 = vmul.f32 %v654, %v660
        %v663 = vadd.f32 %v391, %v661
        %v664 = vadd.f32 %v392, %v662
        %v667 = vcombine.high %v663, %v663
        %v669 = vunpack.c.l.s4 1966171168
        %v670 = vunpack.c.0.s8 %v669
        %v671 = vlaneseq
        %v672 = vshrl.u32 %v671, 7
        %v673 = vsub.s32 %v670, %v672
        %v674 = vrot.slane %v663, %v673
        %v676 = vunpack.c.l.s4 1966171168
        %v677 = vunpack.c.0.s8 %v676
        %v678 = vlaneseq
        %v679 = vshrl.u32 %v678, 7
        %v680 = vsub.s32 %v677, %v679
        %v681 = vrot.slane %v667, %v680
        %v682 = vcombine.high %v674, %v674
        %v683 = vcombine.high %v681, %v681
        %v685 = vunpack.c.l.s4 1966171168
        %v686 = vunpack.c.0.s8 %v685
        %v687 = vlaneseq
        %v688 = vshrl.u32 %v687, 7
        %v689 = vsub.s32 %v686, %v688
        %v690 = vrot.slane %v674, %v689
        %v692 = vunpack.c.l.s4 1966171168
        %v693 = vunpack.c.0.s8 %v692
        %v694 = vlaneseq
        %v695 = vshrl.u32 %v694, 7
        %v696 = vsub.s32 %v693, %v695
        %v697 = vrot.slane %v681, %v696
        %v699 = vunpack.c.l.s4 1966171168
        %v700 = vunpack.c.0.s8 %v699
        %v701 = vlaneseq
        %v702 = vshrl.u32 %v701, 7
        %v703 = vsub.s32 %v700, %v702
        %v704 = vrot.slane %v682, %v703
        %v706 = vunpack.c.l.s4 1966171168
        %v707 = vunpack.c.0.s8 %v706
        %v708 = vlaneseq
        %v709 = vshrl.u32 %v708, 7
        %v710 = vsub.s32 %v707, %v709
        %v711 = vrot.slane %v683, %v710
        %v712 = vcombine.high %v690, %v690
        %v713 = vcombine.high %v697, %v697
        %v714 = vcombine.high %v704, %v704
        %v715 = vcombine.high %v711, %v711
        %v716 = vcombine.high %v664, %v664
        %v718 = vunpack.c.l.s4 1966171168
        %v719 = vunpack.c.0.s8 %v718
        %v720 = vlaneseq
        %v721 = vshrl.u32 %v720, 7
        %v722 = vsub.s32 %v719, %v721
        %v723 = vrot.slane %v664, %v722
        %v725 = vunpack.c.l.s4 1966171168
        %v726 = vunpack.c.0.s8 %v725
        %v727 = vlaneseq
        %v728 = vshrl.u32 %v727, 7
        %v729 = vsub.s32 %v726, %v728
        %v730 = vrot.slane %v716, %v729
        %v731 = vcombine.high %v723, %v723
        %v732 = vcombine.high %v730, %v730
        %v734 = vunpack.c.l.s4 1966171168
        %v735 = vunpack.c.0.s8 %v734
        %v736 = vlaneseq
        %v737 = vshrl.u32 %v736, 7
        %v738 = vsub.s32 %v735, %v737
        %v739 = vrot.slane %v723, %v738
        %v741 = vunpack.c.l.s4 1966171168
        %v742 = vunpack.c.0.s8 %v741
        %v743 = vlaneseq
        %v744 = vshrl.u32 %v743, 7
        %v745 = vsub.s32 %v742, %v744
        %v746 = vrot.slane %v730, %v745
        %v748 = vunpack.c.l.s4 1966171168
        %v749 = vunpack.c.0.s8 %v748
        %v750 = vlaneseq
        %v751 = vshrl.u32 %v750, 7
        %v752 = vsub.s32 %v749, %v751
        %v753 = vrot.slane %v731, %v752
        %v755 = vunpack.c.l.s4 1966171168
        %v756 = vunpack.c.0.s8 %v755
        %v757 = vlaneseq
        %v758 = vshrl.u32 %v757, 7
        %v759 = vsub.s32 %v756, %v758
        %v760 = vrot.slane %v732, %v759
        %v761 = vcombine.high %v739, %v739
        %v762 = vcombine.high %v746, %v746
        %v763 = vcombine.high %v753, %v753
        %v764 = vcombine.high %v760, %v760
        %v765 = vcombine.low %v690, %v704
        %v766 = vcombine.low %v712, %v714
        %v767 = vcombine.low %v697, %v711
        %v768 = vcombine.low %v713, %v715
        %v770 = vunpack.c.l.s4 1966171168
        %v771 = vunpack.c.0.s8 %v770
        %v772 = vlaneseq
        %v773 = vshrl.u32 %v772, 7
        %v774 = vsub.s32 %v771, %v773
        %v775 = vrot.slane %v765, %v774
        %v777 = vunpack.c.l.s4 1966171168
        %v778 = vunpack.c.0.s8 %v777
        %v779 = vlaneseq
        %v780 = vshrl.u32 %v779, 7
        %v781 = vsub.s32 %v778, %v780
        %v782 = vrot.slane %v766, %v781
        %v784 = vunpack.c.l.s4 1966171168
        %v785 = vunpack.c.0.s8 %v784
        %v786 = vlaneseq
        %v787 = vshrl.u32 %v786, 7
        %v788 = vsub.s32 %v785, %v787
        %v789 = vrot.slane %v767, %v788
        %v791 = vunpack.c.l.s4 1966171168
        %v792 = vunpack.c.0.s8 %v791
        %v793 = vlaneseq
        %v794 = vshrl.u32 %v793, 7
        %v795 = vsub.s32 %v792, %v794
        %v796 = vrot.slane %v768, %v795
        %v797 = vcombine.low %v775, %v782
        %v798 = vcombine.low %v789, %v796
        %v800 = vunpack.c.l.s4 1966171168
        %v801 = vunpack.c.0.s8 %v800
        %v802 = vlaneseq
        %v803 = vshrl.u32 %v802, 7
        %v804 = vsub.s32 %v801, %v803
        %v805 = vrot.slane %v797, %v804
        %v807 = vunpack.c.l.s4 1966171168
        %v808 = vunpack.c.0.s8 %v807
        %v809 = vlaneseq
        %v810 = vshrl.u32 %v809, 7
        %v811 = vsub.s32 %v808, %v810
        %v812 = vrot.slane %v798, %v811
        %v813 = vcombine.low %v805, %v812
        %v814 = vcombine.low %v739, %v753
        %v815 = vcombine.low %v761, %v763
        %v816 = vcombine.low %v746, %v760
        %v817 = vcombine.low %v762, %v764
        %v819 = vunpack.c.l.s4 1966171168
        %v820 = vunpack.c.0.s8 %v819
        %v821 = vlaneseq
        %v822 = vshrl.u32 %v821, 7
        %v823 = vsub.s32 %v820, %v822
        %v824 = vrot.slane %v814, %v823
        %v826 = vunpack.c.l.s4 1966171168
        %v827 = vunpack.c.0.s8 %v826
        %v828 = vlaneseq
        %v829 = vshrl.u32 %v828, 7
        %v830 = vsub.s32 %v827, %v829
        %v831 = vrot.slane %v815, %v830
        %v833 = vunpack.c.l.s4 1966171168
        %v834 = vunpack.c.0.s8 %v833
        %v835 = vlaneseq
        %v836 = vshrl.u32 %v835, 7
        %v837 = vsub.s32 %v834, %v836
        %v838 = vrot.slane %v816, %v837
        %v840 = vunpack.c.l.s4 1966171168
        %v841 = vunpack.c.0.s8 %v840
        %v842 = vlaneseq
        %v843 = vshrl.u32 %v842, 7
        %v844 = vsub.s32 %v841, %v843
        %v845 = vrot.slane %v817, %v844
        %v846 = vcombine.low %v824, %v831
        %v847 = vcombine.low %v838, %v845
        %v849 = vunpack.c.l.s4 1966171168
        %v850 = vunpack.c.0.s8 %v849
        %v851 = vlaneseq
        %v852 = vshrl.u32 %v851, 7
        %v853 = vsub.s32 %v850, %v852
        %v854 = vrot.slane %v846, %v853
        %v856 = vunpack.c.l.s4 1966171168
        %v857 = vunpack.c.0.s8 %v856
        %v858 = vlaneseq
        %v859 = vshrl.u32 %v858, 7
        %v860 = vsub.s32 %v857, %v859
        %v861 = vrot.slane %v847, %v860
        %v862 = vcombine.low %v854, %v861
        %863 = vset.pattern.permute.xlu0 0
        %864 = vperm.xlu0 %863, %v813
        %v865 = vpop.permute.xlu0 %864
        %866 = vset.pattern.permute.xlu0 0
        %867 = vperm.xlu0 %866, %v862
        %v868 = vpop.permute.xlu0 %867
        %v869 = vlaneseq
        %v870 = vshrl.u32 %v869, 7
        %v871 = vsub.s32 %v622, %v870
        %v872 = vrot.slane %v865, %v871
        %v873 = vlaneseq
        %v874 = vshrl.u32 %v873, 7
        %v875 = vsub.s32 %v627, %v874
        %v876 = vrot.slane %v868, %v875
        %v877 = vsel %vm632, %v876, %v872
        %v879 = vunpack.c.l.s4 1966171168
        %v880 = vunpack.c.0.s8 %v879
        %v881 = vlaneseq
        %v882 = vshrl.u32 %v881, 7
        %v883 = vsub.s32 %v880, %v882
        %v884 = vrot.slane %v877, %v883
        %v886 = vunpack.c.l.s4 1966171168
        %v887 = vunpack.c.0.s8 %v886
        %v888 = vlaneseq
        %v889 = vshrl.u32 %v888, 7
        %v890 = vsub.s32 %v887, %v889
        %v891 = vrot.slane %v884, %v890
        %v893 = vadd.f32 %v652, %v891
        %894 = vst.msk [vmem:[#allocation3] sm:$0x1] %vm650, %v893
        %p895 = scmp.eq.s32.totalorder %s35, 1
        // Predicated region
        $region65: #{tpu_custom_call.1} parent=43 // pred_check
          %p896 = pneg %p895
        $region66: #{tpu_custom_call.1} parent=43 // pred_check_branch
          %898 = sbr.rel (%p896) target = $region68
        $region67: #{tpu_custom_call.1} parent=43 // pred_region
          %v899 = vld [vmem:[#allocation2] sm:$0x1]
          %v900 = vld [vmem:[#allocation3] sm:$0x1]
          %v901 = vmul.f32 %v900, 0.003921569
          %v902 = vmax.f32 %v901, 0.0
          %v903 = vrsqrt.pop %v902
          %v904 = vmul.f32 %v902, %v903
          %vm905 = vcmp.eq.f32.partialorder %v902, inf
          %v906 = vsel %vm905, %v902, %v904
          %vm907 = vcmp.eq.f32.partialorder %v902, 0.0
          %v908 = vand.u32 %v902, 2147483648
          %v909 = vsel %vm907, %v908, %v906
          %v910 = vld [vmem:[#allocation7] sm:$0xff]
          %v911 = vld [vmem:[#allocation7 + $0x8] sm:$0xff]
          %v912 = vld [vmem:[#allocation9] sm:$0xff]
          %v913 = vld [vmem:[#allocation9 + $0x8] sm:$0xff]
          %vm914 = vcmask 130048
          %v916 = vsel %vm914, %v909, 0
          %918 = vmatprep.subr.mxu0 0.0
          %919 = vmatpush1.msra.mxu0 0.0
          %920 = vmatprep.subr.mxu0 0.0
          %921 = vmatpush1.msra.mxu0 0.0
          %922 = vmatprep.subr.mxu0 0.0
          %923 = vmatpush1.msra.mxu0 0.0
          %924 = vmatprep.subr.mxu0 0.0
          %925 = vmatpush1.msra.mxu0 0.0
          %926 = vmatprep.subr.mxu0 0.0
          %927 = vmatpush1.msra.mxu0 0.0
          %928 = vmatprep.subr.mxu0 0.0
          %929 = vmatpush1.msra.mxu0 0.0
          %930 = vmatprep.subr.mxu0 0.0
          %931 = vmatpush1.msra.mxu0 0.0
          %932 = vmatprep.subr.mxu0 0.0
          %933 = vmatpush1.msra.mxu0 0.0
          %934 = vmatprep.subr.mxu0 0.0
          %935 = vmatpush1.msra.mxu0 0.0
          %936 = vmatprep.subr.mxu0 0.0
          %937 = vmatpush1.msra.mxu0 0.0
          %938 = vmatprep.subr.mxu0 0.0
          %939 = vmatpush1.msra.mxu0 0.0
          %940 = vmatprep.subr.mxu0 0.0
          %941 = vmatpush1.msra.mxu0 0.0
          %942 = vmatprep.subr.mxu0 0.0
          %943 = vmatpush1.msra.mxu0 0.0
          %944 = vmatprep.subr.mxu0 0.0
          %945 = vmatpush1.msra.mxu0 0.0
          %946 = vmatprep.subr.mxu0 0.0
          %947 = vmatpush1.msra.mxu0 %v913
          %948 = vmatprep.subr.mxu0 0.0
          %949 = vmatpush1.msra.mxu0 %v912
          %950 = vmatprep.subr.mxu0 0.0
          %951 = vmatpush2.msra.mxu0 0.0
          %952 = vmatprep.subr.mxu0 0.0
          %953 = vmatpush2.msra.mxu0 0.0
          %954 = vmatprep.subr.mxu0 0.0
          %955 = vmatpush2.msra.mxu0 0.0
          %956 = vmatprep.subr.mxu0 0.0
          %957 = vmatpush2.msra.mxu0 0.0
          %958 = vmatprep.subr.mxu0 0.0
          %959 = vmatpush2.msra.mxu0 0.0
          %960 = vmatprep.subr.mxu0 0.0
          %961 = vmatpush2.msra.mxu0 0.0
          %962 = vmatprep.subr.mxu0 0.0
          %963 = vmatpush2.msra.mxu0 0.0
          %964 = vmatprep.subr.mxu0 0.0
          %965 = vmatpush2.msra.mxu0 0.0
          %966 = vmatprep.subr.mxu0 0.0
          %967 = vmatpush2.msra.mxu0 0.0
          %968 = vmatprep.subr.mxu0 0.0
          %969 = vmatpush2.msra.mxu0 0.0
          %970 = vmatprep.subr.mxu0 0.0
          %971 = vmatpush2.msra.mxu0 0.0
          %972 = vmatprep.subr.mxu0 0.0
          %973 = vmatpush2.msra.mxu0 0.0
          %974 = vmatprep.subr.mxu0 0.0
          %975 = vmatpush2.msra.mxu0 0.0
          %976 = vmatprep.subr.mxu0 0.0
          %977 = vmatpush2.msra.mxu0 0.0
          %978 = vmatprep.subr.mxu0 0.0
          %979 = vmatpush2.msra.mxu0 0.0
          %980 = vmatprep.subr.mxu0 0.0
          %981 = vmatpush2.msra.mxu0 0.0
          %982 = vmatprep.mubr.f32.mxu0 0.0
          %983 = vmatmul.mubr.f32.gmra.mxu0 %v916
          %v984 = vpop.f32.mrf.mxu0
          %v985 = vadd.f32 0.0, %v984
          %v986 = vpop.f32.mrf.mxu0
          %987 = vdwg.mxu0
          %v989 = vsel %vm914, %v899, 0
          %991 = vmatprep.subr.mxu0 0.0
          %992 = vmatpush1.msra.mxu0 0.0
          %993 = vmatprep.subr.mxu0 0.0
          %994 = vmatpush1.msra.mxu0 0.0
          %995 = vmatprep.subr.mxu0 0.0
          %996 = vmatpush1.msra.mxu0 0.0
          %997 = vmatprep.subr.mxu0 0.0
          %998 = vmatpush1.msra.mxu0 0.0
          %999 = vmatprep.subr.mxu0 0.0
          %1000 = vmatpush1.msra.mxu0 0.0
          %1001 = vmatprep.subr.mxu0 0.0
          %1002 = vmatpush1.msra.mxu0 0.0
          %1003 = vmatprep.subr.mxu0 0.0
          %1004 = vmatpush1.msra.mxu0 0.0
          %1005 = vmatprep.subr.mxu0 0.0
          %1006 = vmatpush1.msra.mxu0 0.0
          %1007 = vmatprep.subr.mxu0 0.0
          %1008 = vmatpush1.msra.mxu0 0.0
          %1009 = vmatprep.subr.mxu0 0.0
          %1010 = vmatpush1.msra.mxu0 0.0
          %1011 = vmatprep.subr.mxu0 0.0
          %1012 = vmatpush1.msra.mxu0 0.0
          %1013 = vmatprep.subr.mxu0 0.0
          %1014 = vmatpush1.msra.mxu0 0.0
          %1015 = vmatprep.subr.mxu0 0.0
          %1016 = vmatpush1.msra.mxu0 0.0
          %1017 = vmatprep.subr.mxu0 0.0
          %1018 = vmatpush1.msra.mxu0 0.0
          %1019 = vmatprep.subr.mxu0 0.0
          %1020 = vmatpush1.msra.mxu0 %v911
          %1021 = vmatprep.subr.mxu0 0.0
          %1022 = vmatpush1.msra.mxu0 %v910
          %1023 = vmatprep.subr.mxu0 0.0
          %1024 = vmatpush2.msra.mxu0 0.0
          %1025 = vmatprep.subr.mxu0 0.0
          %1026 = vmatpush2.msra.mxu0 0.0
          %1027 = vmatprep.subr.mxu0 0.0
          %1028 = vmatpush2.msra.mxu0 0.0
          %1029 = vmatprep.subr.mxu0 0.0
          %1030 = vmatpush2.msra.mxu0 0.0
          %1031 = vmatprep.subr.mxu0 0.0
          %1032 = vmatpush2.msra.mxu0 0.0
          %1033 = vmatprep.subr.mxu0 0.0
          %1034 = vmatpush2.msra.mxu0 0.0
          %1035 = vmatprep.subr.mxu0 0.0
          %1036 = vmatpush2.msra.mxu0 0.0
          %1037 = vmatprep.subr.mxu0 0.0
          %1038 = vmatpush2.msra.mxu0 0.0
          %1039 = vmatprep.subr.mxu0 0.0
          %1040 = vmatpush2.msra.mxu0 0.0
          %1041 = vmatprep.subr.mxu0 0.0
          %1042 = vmatpush2.msra.mxu0 0.0
          %1043 = vmatprep.subr.mxu0 0.0
          %1044 = vmatpush2.msra.mxu0 0.0
          %1045 = vmatprep.subr.mxu0 0.0
          %1046 = vmatpush2.msra.mxu0 0.0
          %1047 = vmatprep.subr.mxu0 0.0
          %1048 = vmatpush2.msra.mxu0 0.0
          %1049 = vmatprep.subr.mxu0 0.0
          %1050 = vmatpush2.msra.mxu0 0.0
          %1051 = vmatprep.subr.mxu0 0.0
          %1052 = vmatpush2.msra.mxu0 0.0
          %1053 = vmatprep.subr.mxu0 0.0
          %1054 = vmatpush2.msra.mxu0 0.0
          %1055 = vmatprep.mubr.f32.mxu0 0.0
          %1056 = vmatmul.mubr.f32.gmra.mxu0 %v989
          %v1057 = vpop.f32.mrf.mxu0
          %v1058 = vadd.f32 %v985, %v1057
          %v1059 = vpop.f32.mrf.mxu0
          %1060 = vdwg.mxu0
          %v1061 = vld [vmem:[%s3] sm:$0x1]
          %v1062 = vadd.f32 %v1058, %v1061
          %1063 = vst [vmem:[%s364] sm:$0x1] %v1062
          %v1064 = vmax.f32 %v1062, 0.0
          %v1065 = vld [vmem:[#allocation10] sm:$0xff]
          %v1066 = vld [vmem:[#allocation10 + $0x8] sm:$0xff]
          %v1067 = vld [vmem:[#allocation10 + $0x10] sm:$0xff]
          %v1068 = vld [vmem:[#allocation10 + $0x18] sm:$0xff]
          %v1069 = vld [vmem:[#allocation10 + $0x20] sm:$0xff]
          %v1070 = vld [vmem:[#allocation10 + $0x28] sm:$0xff]
          %v1071 = vld [vmem:[#allocation10 + $0x30] sm:$0xff]
          %v1072 = vld [vmem:[#allocation10 + $0x38] sm:$0xff]
          %v1073 = vld [vmem:[#allocation10 + $0x40] sm:$0xff]
          %v1074 = vld [vmem:[#allocation10 + $0x48] sm:$0xff]
          %v1075 = vld [vmem:[#allocation10 + $0x50] sm:$0xff]
          %v1076 = vld [vmem:[#allocation10 + $0x58] sm:$0xff]
          %v1077 = vld [vmem:[#allocation10 + $0x60] sm:$0xff]
          %v1078 = vld [vmem:[#allocation10 + $0x68] sm:$0xff]
          %v1079 = vld [vmem:[#allocation10 + $0x70] sm:$0xff]
          %v1080 = vld [vmem:[#allocation10 + $0x78] sm:$0xff]
          %v1081 = vld [vmem:[%s5] sm:$0x1]
          %1082 = vmatprep.subr.mxu0 0.0
          %1083 = vmatpush1.msra.mxu0 %v1080
          %1084 = vmatprep.subr.mxu0 0.0
          %1085 = vmatpush1.msra.mxu0 %v1079
          %1086 = vmatprep.subr.mxu0 0.0
          %1087 = vmatpush1.msra.mxu0 %v1078
          %1088 = vmatprep.subr.mxu0 0.0
          %1089 = vmatpush1.msra.mxu0 %v1077
          %1090 = vmatprep.subr.mxu0 0.0
          %1091 = vmatpush1.msra.mxu0 %v1076
          %1092 = vmatprep.subr.mxu0 0.0
          %1093 = vmatpush1.msra.mxu0 %v1075
          %1094 = vmatprep.subr.mxu0 0.0
          %1095 = vmatpush1.msra.mxu0 %v1074
          %1096 = vmatprep.subr.mxu0 0.0
          %1097 = vmatpush1.msra.mxu0 %v1073
          %1098 = vmatprep.subr.mxu0 0.0
          %1099 = vmatpush1.msra.mxu0 %v1072
          %1100 = vmatprep.subr.mxu0 0.0
          %1101 = vmatpush1.msra.mxu0 %v1071
          %1102 = vmatprep.subr.mxu0 0.0
          %1103 = vmatpush1.msra.mxu0 %v1070
          %1104 = vmatprep.subr.mxu0 0.0
          %1105 = vmatpush1.msra.mxu0 %v1069
          %1106 = vmatprep.subr.mxu0 0.0
          %1107 = vmatpush1.msra.mxu0 %v1068
          %1108 = vmatprep.subr.mxu0 0.0
          %1109 = vmatpush1.msra.mxu0 %v1067
          %1110 = vmatprep.subr.mxu0 0.0
          %1111 = vmatpush1.msra.mxu0 %v1066
          %1112 = vmatprep.subr.mxu0 0.0
          %1113 = vmatpush1.msra.mxu0 %v1065
          %1114 = vmatprep.subr.mxu0 0.0
          %1115 = vmatpush2.msra.mxu0 0.0
          %1116 = vmatprep.subr.mxu0 0.0
          %1117 = vmatpush2.msra.mxu0 0.0
          %1118 = vmatprep.subr.mxu0 0.0
          %1119 = vmatpush2.msra.mxu0 0.0
          %1120 = vmatprep.subr.mxu0 0.0
          %1121 = vmatpush2.msra.mxu0 0.0
          %1122 = vmatprep.subr.mxu0 0.0
          %1123 = vmatpush2.msra.mxu0 0.0
          %1124 = vmatprep.subr.mxu0 0.0
          %1125 = vmatpush2.msra.mxu0 0.0
          %1126 = vmatprep.subr.mxu0 0.0
          %1127 = vmatpush2.msra.mxu0 0.0
          %1128 = vmatprep.subr.mxu0 0.0
          %1129 = vmatpush2.msra.mxu0 0.0
          %1130 = vmatprep.subr.mxu0 0.0
          %1131 = vmatpush2.msra.mxu0 0.0
          %1132 = vmatprep.subr.mxu0 0.0
          %1133 = vmatpush2.msra.mxu0 0.0
          %1134 = vmatprep.subr.mxu0 0.0
          %1135 = vmatpush2.msra.mxu0 0.0
          %1136 = vmatprep.subr.mxu0 0.0
          %1137 = vmatpush2.msra.mxu0 0.0
          %1138 = vmatprep.subr.mxu0 0.0
          %1139 = vmatpush2.msra.mxu0 0.0
          %1140 = vmatprep.subr.mxu0 0.0
          %1141 = vmatpush2.msra.mxu0 0.0
          %1142 = vmatprep.subr.mxu0 0.0
          %1143 = vmatpush2.msra.mxu0 0.0
          %1144 = vmatprep.subr.mxu0 0.0
          %1145 = vmatpush2.msra.mxu0 0.0
          %1146 = vmatprep.mubr.f32.mxu0 0.0
          %1147 = vmatmul.mubr.f32.gmra.mxu0 %v1064
          %v1148 = vpop.f32.mrf.mxu0
          %v1149 = vadd.f32 %v1081, %v1148
          %v1150 = vpop.f32.mrf.mxu0
          %1151 = vdwg.mxu0
          %1152 = vst [vmem:[%s358] sm:$0x1] %v1149
        $region68: #{tpu_custom_call.1} parent=43 // pred_fallthru
          _
        %s1153 = sand.u32 %s183, 1
        %s1154 = scalar_lea.sflag [#allocation6], %s1153
        %s1155 = sand.u32 %s183, 1
        %s1156 = scalar_lea.vmem [#allocation12], %s1155
        %s1157 = sand.u32 %s209, 1
        %s1158 = scalar_lea.sflag [#allocation14], %s1157
        %s1159 = sand.u32 %s209, 1
        %s1160 = scalar_lea.vmem [#allocation13], %s1159
        // Predicated region
        $region69: #{tpu_custom_call.1} parent=43 // pred_check
          %p1161 = pneg %p193
        $region70: #{tpu_custom_call.1} parent=43 // pred_check_branch
          %1163 = sbr.rel (%p1161) target = $region72
        $region71: #{tpu_custom_call.1} parent=43 // pred_region
          %s1165 = ssub.s32 16, 16
          %1166 = vsyncadd %s1154, %s1165
          %s1167 = smul.addr %s34, 16
          %s1168 = scalar_lea.hbm %s6, %s1167
          %s1170 = sshll.u32 %s1156, 4
          %s1171 = int_to_ptr.vmem [resolvable:$true] %s1170
          %1173 = dma.vmem_to_hbm [thread:$0]  %s1171, 16, %s1168, %s1154
        $region72: #{tpu_custom_call.1} parent=43 // pred_fallthru
          _
        // Predicated region
        $region73: #{tpu_custom_call.1} parent=43 // pred_check
          %p1174 = pneg %p219
        $region74: #{tpu_custom_call.1} parent=43 // pred_check_branch
          %1176 = sbr.rel (%p1174) target = $region76
        $region75: #{tpu_custom_call.1} parent=43 // pred_region
          %s1178 = ssub.s32 16, 16
          %1179 = vsyncadd %s1158, %s1178
          %s1180 = smul.addr %s34, 16
          %s1181 = scalar_lea.hbm %s7, %s1180
          %s1183 = sshll.u32 %s1160, 4
          %s1184 = int_to_ptr.vmem [resolvable:$true] %s1183
          %1186 = dma.vmem_to_hbm [thread:$0]  %s1184, 16, %s1181, %s1158
        $region76: #{tpu_custom_call.1} parent=43 // pred_fallthru
          _
      $region44: #{tpu_custom_call.1} parent=5 // pred_fallthru
        _
      %p1187 = scmp.le.s32.totalorder 2, %s25
      // Predicated region
      $region77: #{tpu_custom_call.1} parent=5 // pred_check
        %p1188 = pneg %p1187
      $region78: #{tpu_custom_call.1} parent=5 // pred_check_branch
        %1190 = sbr.rel (%p1188) target = $region80
      $region79: #{tpu_custom_call.1} parent=5 // pred_region
        %s1191 = ssub.s32 %s25, 2
        // Predicated region
        $region81: #{tpu_custom_call.1} parent=79 // pred_check
          %p1192 = pneg %p199
        $region82: #{tpu_custom_call.1} parent=79 // pred_check_branch
          %1194 = sbr.rel (%p1192) target = $region84
        $region83: #{tpu_custom_call.1} parent=79 // pred_region
          %s1195 = sand.u32 %s184, 1
          %s1196 = scalar_lea.sflag [#allocation6], %s1195
          %s1197 = sand.u32 %s184, 1
          %s1198 = scalar_lea.vmem [#allocation12], %s1197
          %1199 = dma.done %s1196, 16
        $region84: #{tpu_custom_call.1} parent=79 // pred_fallthru
          _
        // Predicated region
        $region85: #{tpu_custom_call.1} parent=79 // pred_check
          %p1200 = pneg %p225
        $region86: #{tpu_custom_call.1} parent=79 // pred_check_branch
          %1202 = sbr.rel (%p1200) target = $region88
        $region87: #{tpu_custom_call.1} parent=79 // pred_region
          %s1203 = sand.u32 %s210, 1
          %s1204 = scalar_lea.sflag [#allocation14], %s1203
          %s1205 = sand.u32 %s210, 1
          %s1206 = scalar_lea.vmem [#allocation13], %s1205
          %1207 = dma.done %s1204, 16
        $region88: #{tpu_custom_call.1} parent=79 // pred_fallthru
          _
      $region80: #{tpu_custom_call.1} parent=5 // pred_fallthru
        _
    $region6: #{tpu_custom_call.1} parent=1 // loop_footer
      %s29 = sadd.s32 1, %s25
    $region7: #{tpu_custom_call.1} parent=1 // loop_footer_branch
      %24 = sbr.rel target = $region3
    $region8: #{tpu_custom_call.1} parent=1 // loop_exit
      _
    %1208 = vsyncpa [#allocation5], 1
    %s1209 = scalar_lea.sflag [#allocation5], 1
    %1210 = vsyncpa %s1209, 1
    %1211 = vsyncpa [#allocation8], 1
    %1212 = vsyncpa [#allocation11], 1
    %1213 = vsyncpa [#allocation6], 1
    %s1214 = scalar_lea.sflag [#allocation6], 1
    %1215 = vsyncpa %s1214, 1
    %1216 = vsyncpa [#allocation14], 1
    %s1217 = scalar_lea.sflag [#allocation14], 1
    %1218 = vsyncpa %s1217, 1

// kernel: tpu_custom_call.1
$region0: #{tpu_custom_call.1}
  #allocation0 [shape = 'u32[]', space=smem, size = 0x4, offset = 0x4, fixed_abs, tag = 'smem constant byte address 0x4 - core index']
  #allocation1 [shape = 'u32[144,128]{1,0:T(1,128)}', space=vmem, size = 0x12000, scoped, tag = 'internal scratch']
  #allocation2 [shape = 'f32[1,16]{1,0:T(1,128)}', space=vmem, size = 0x200, scoped, tag = 'scratch operand']
  #allocation3 [shape = 'f32[1,16]{1,0:T(1,128)}', space=vmem, size = 0x200, scoped, tag = 'scratch operand']
  %s0 = inlined_call_operand.hbm [shape: f32[2,16,256], index: 0, kind: input, shape index: {}]
  %s1 = inlined_call_operand.hbm [shape: f32[16,128], index: 1, kind: input, shape index: {}]
  %s2 = inlined_call_operand.hbm [shape: f32[16,128], index: 2, kind: input, shape index: {}]
  %s3 = inlined_call_operand.vmem [shape: f32[1,128], index: 3, kind: input, shape index: {}]
  %s4 = inlined_call_operand.hbm [shape: f32[128,128], index: 4, kind: input, shape index: {}]
  %s5 = inlined_call_operand.vmem [shape: f32[1,128], index: 5, kind: input, shape index: {}]
  %s6 = inlined_call_operand.hbm [shape: f32[2,1,128], index: 6, kind: output, shape index: {0}]
  %s7 = inlined_call_operand.hbm [shape: f32[2,1,128], index: 7, kind: output, shape index: {1}]
  %8 = xla_tuple %s6, %s7
  %s9 = sld [smem:[#allocation0]]
  $region89: #{tpu_custom_call.1} parent=0
    _
  %s11 = ssub.s32 1, %s9
  %s12 = scalar_select 0, %s11, %s9
  $region1: #{tpu_custom_call.1} parent=0
    #allocation4 [shape = 'u8[16384]{0}', space=vmem, size = 0x4000, scoped, tag = 'input window, operand 0']
    #allocation5 [shape = 's32[2]{0}', space=sflag, size = 0x8, scoped, tag = 'scoped memory for tpu_custom_call.1']
    #allocation6 [shape = 's32[2]{0}', space=sflag, size = 0x8, scoped, tag = 'scoped memory for tpu_custom_call.1']
    #allocation7 [shape = 'u8[8192]{0}', space=vmem, size = 0x2000, scoped, tag = 'input window, operand 1, single buffered']
    #allocation8 [shape = 's32[1]{0}', space=sflag, size = 0x4, scoped, tag = 'scoped memory for tpu_custom_call.1']
    #allocation9 [shape = 'u8[8192]{0}', space=vmem, size = 0x2000, scoped, tag = 'input window, operand 2, single buffered']
    #allocation10 [shape = 'u8[65536]{0}', space=vmem, size = 0x10000, scoped, tag = 'input window, operand 4, single buffered']
    #allocation11 [shape = 's32[1]{0}', space=sflag, size = 0x4, scoped, tag = 'scoped memory for tpu_custom_call.1']
    #allocation12 [shape = 'u8[1024]{0}', space=vmem, size = 0x400, scoped, tag = 'output window, operand 0']
    #allocation13 [shape = 'u8[1024]{0}', space=vmem, size = 0x400, scoped, tag = 'output window, operand 1']
    #allocation14 [shape = 's32[2]{0}', space=sflag, size = 0x8, scoped, tag = 'scoped memory for tpu_custom_call.1']
    %13 = vsyncpa [#allocation5], 0
    %s14 = scalar_lea.sflag [#allocation5], 1
    %15 = vsyncpa %s14, 0
    %16 = vsyncpa [#allocation8], 0
    %17 = vsyncpa [#allocation11], 0
    %18 = vsyncpa [#allocation6], 0
    %s19 = scalar_lea.sflag [#allocation6], 1
    %20 = vsyncpa %s19, 0
    %21 = vsyncpa [#allocation14], 0
    %s22 = scalar_lea.sflag [#allocation14], 1
    %23 = vsyncpa %s22, 0
    loop: start=0, step=1, limit=6
    $region2: #{tpu_custom_call.1} parent=1 // loop_pre_header
      _
    $region3: #{tpu_custom_call.1} parent=1 // loop_header
      %s25 = sphi 0, %s29
      %p26 = scmp.ge.s32.totalorder %s25, 6
      %s32 = sphi 0, %s44
      %s33 = sphi 0, %s40
      %s34 = sphi 0, %s32
      %s35 = sphi 0, %s33
      %s36 = sphi 0, %s34
      %s37 = sphi 0, %s35
      %s49 = sphi 0, %s51
      %s52 = sphi 0, %s49
      %s53 = sphi 0, %s52
      %s69 = sphi 0, %s53
      %s73 = sphi 0, %s73
      %s75 = sphi 0, %s73
      %s76 = sphi 0, %s75
      %s90 = sphi 0, %s76
      %s94 = sphi 0, %s94
      %s96 = sphi 0, %s94
      %s97 = sphi 0, %s96
      %s111 = sphi 0, %s97
      %s115 = sphi 0, %s115
      %s117 = sphi 0, %s115
      %s118 = sphi 0, %s117
      %s132 = sphi 0, %s118
      %s136 = sphi 0, %s136
      %s138 = sphi 0, %s136
      %s139 = sphi 0, %s138
      %s153 = sphi 0, %s139
      %s157 = sphi 0, %s157
      %s159 = sphi 0, %s157
      %s160 = sphi 0, %s159
      %s174 = sphi 0, %s160
      %s180 = sphi 0, %s182
      %s183 = sphi 0, %s180
      %s184 = sphi 0, %s183
      %s200 = sphi 0, %s184
      %s206 = sphi 0, %s208
      %s209 = sphi 0, %s206
      %s210 = sphi 0, %s209
      %s226 = sphi 0, %s210
    $region4: #{tpu_custom_call.1} parent=1 // loop_header_branch
      %28 = sbr.rel (%p26) target = $region8
    $region5: #{tpu_custom_call.1} parent=1 // loop_body
      %s30 = ssub.s32 %s25, 1
      %s31 = ssub.s32 %s25, 2
      %s38 = sadd.s32 1, %s33
      %p39 = scmp.ge.s32.totalorder %s38, 2
      %s40 = scalar_select %p39, 0, %s38
      %s41 = sadd.s32 1, %s32
      %s42 = scalar_select %p39, %s41, %s32
      %p43 = scmp.ge.s32.totalorder %s42, 2
      %s44 = scalar_select %p43, 0, %s42
      %s45 = ssub.s32 %s32, %s44
      %s46 = ssub.s32 %s33, %s40
      %s47 = sor.u32 %s45, %s46
      %p48 = scmp.eq.s32.totalorder %s47, 0
      %s50 = sadd.s32 %s49, 1
      %s51 = scalar_select %p48, %s49, %s50
      %p54 = pneg %p48
      %p55 = scmp.eq.s32.totalorder %s25, 3
      %p56 = por %p54, %p55
      %p57 = scmp.ne.s32.totalorder %s49, %s52
      %p58 = scmp.eq.s32.totalorder %s25, 0
      %p59 = por %p57, %p58
      %p60 = scmp.ne.s32.totalorder %s49, %s52
      %p61 = scmp.eq.s32.totalorder %s30, 3
      %p62 = por %p60, %p61
      %p63 = scmp.ne.s32.totalorder %s52, %s53
      %p64 = scmp.eq.s32.totalorder %s30, 0
      %p65 = por %p63, %p64
      %p66 = scmp.ne.s32.totalorder %s52, %s53
      %p67 = scmp.eq.s32.totalorder %s31, 3
      %p68 = por %p66, %p67
      %p70 = scmp.ne.s32.totalorder %s53, %s69
      %p71 = scmp.eq.s32.totalorder %s31, 0
      %p72 = por %p70, %p71
      %s74 = sadd.s32 %s73, 1
      %p77 = scmp.eq.s32.totalorder %s25, 3
      %p78 = scmp.ne.s32.totalorder %s73, %s75
      %p79 = scmp.eq.s32.totalorder %s25, 0
      %p80 = por %p78, %p79
      %p81 = scmp.ne.s32.totalorder %s73, %s75
      %p82 = scmp.eq.s32.totalorder %s30, 3
      %p83 = por %p81, %p82
      %p84 = scmp.ne.s32.totalorder %s75, %s76
      %p85 = scmp.eq.s32.totalorder %s30, 0
      %p86 = por %p84, %p85
      %p87 = scmp.ne.s32.totalorder %s75, %s76
      %p88 = scmp.eq.s32.totalorder %s31, 3
      %p89 = por %p87, %p88
      %p91 = scmp.ne.s32.totalorder %s76, %s90
      %p92 = scmp.eq.s32.totalorder %s31, 0
      %p93 = por %p91, %p92
      %s95 = sadd.s32 %s94, 1
      %p98 = scmp.eq.s32.totalorder %s25, 3
      %p99 = scmp.ne.s32.totalorder %s94, %s96
      %p100 = scmp.eq.s32.totalorder %s25, 0
      %p101 = por %p99, %p100
      %p102 = scmp.ne.s32.totalorder %s94, %s96
      %p103 = scmp.eq.s32.totalorder %s30, 3
      %p104 = por %p102, %p103
      %p105 = scmp.ne.s32.totalorder %s96, %s97
      %p106 = scmp.eq.s32.totalorder %s30, 0
      %p107 = por %p105, %p106
      %p108 = scmp.ne.s32.totalorder %s96, %s97
      %p109 = scmp.eq.s32.totalorder %s31, 3
      %p110 = por %p108, %p109
      %p112 = scmp.ne.s32.totalorder %s97, %s111
      %p113 = scmp.eq.s32.totalorder %s31, 0
      %p114 = por %p112, %p113
      %s116 = sadd.s32 %s115, 1
      %p119 = scmp.eq.s32.totalorder %s25, 3
      %p120 = scmp.ne.s32.totalorder %s115, %s117
      %p121 = scmp.eq.s32.totalorder %s25, 0
      %p122 = por %p120, %p121
      %p123 = scmp.ne.s32.totalorder %s115, %s117
      %p124 = scmp.eq.s32.totalorder %s30, 3
      %p125 = por %p123, %p124
      %p126 = scmp.ne.s32.totalorder %s117, %s118
      %p127 = scmp.eq.s32.totalorder %s30, 0
      %p128 = por %p126, %p127
      %p129 = scmp.ne.s32.totalorder %s117, %s118
      %p130 = scmp.eq.s32.totalorder %s31, 3
      %p131 = por %p129, %p130
      %p133 = scmp.ne.s32.totalorder %s118, %s132
      %p134 = scmp.eq.s32.totalorder %s31, 0
      %p135 = por %p133, %p134
      %s137 = sadd.s32 %s136, 1
      %p140 = scmp.eq.s32.totalorder %s25, 3
      %p141 = scmp.ne.s32.totalorder %s136, %s138
      %p142 = scmp.eq.s32.totalorder %s25, 0
      %p143 = por %p141, %p142
      %p144 = scmp.ne.s32.totalorder %s136, %s138
      %p145 = scmp.eq.s32.totalorder %s30, 3
      %p146 = por %p144, %p145
      %p147 = scmp.ne.s32.totalorder %s138, %s139
      %p148 = scmp.eq.s32.totalorder %s30, 0
      %p149 = por %p147, %p148
      %p150 = scmp.ne.s32.totalorder %s138, %s139
      %p151 = scmp.eq.s32.totalorder %s31, 3
      %p152 = por %p150, %p151
      %p154 = scmp.ne.s32.totalorder %s139, %s153
      %p155 = scmp.eq.s32.totalorder %s31, 0
      %p156 = por %p154, %p155
      %s158 = sadd.s32 %s157, 1
      %p161 = scmp.eq.s32.totalorder %s25, 3
      %p162 = scmp.ne.s32.totalorder %s157, %s159
      %p163 = scmp.eq.s32.totalorder %s25, 0
      %p164 = por %p162, %p163
      %p165 = scmp.ne.s32.totalorder %s157, %s159
      %p166 = scmp.eq.s32.totalorder %s30, 3
      %p167 = por %p165, %p166
      %p168 = scmp.ne.s32.totalorder %s159, %s160
      %p169 = scmp.eq.s32.totalorder %s30, 0
      %p170 = por %p168, %p169
      %p171 = scmp.ne.s32.totalorder %s159, %s160
      %p172 = scmp.eq.s32.totalorder %s31, 3
      %p173 = por %p171, %p172
      %p175 = scmp.ne.s32.totalorder %s160, %s174
      %p176 = scmp.eq.s32.totalorder %s31, 0
      %p177 = por %p175, %p176
      %s178 = ssub.s32 %s32, %s44
      %p179 = scmp.eq.s32.totalorder %s178, 0
      %s181 = sadd.s32 %s180, 1
      %s182 = scalar_select %p179, %s180, %s181
      %p185 = pneg %p179
      %p186 = scmp.eq.s32.totalorder %s25, 3
      %p187 = por %p185, %p186
      %p188 = scmp.ne.s32.totalorder %s180, %s183
      %p189 = scmp.eq.s32.totalorder %s25, 0
      %p190 = por %p188, %p189
      %p191 = scmp.ne.s32.totalorder %s180, %s183
      %p192 = scmp.eq.s32.totalorder %s30, 3
      %p193 = por %p191, %p192
      %p194 = scmp.ne.s32.totalorder %s183, %s184
      %p195 = scmp.eq.s32.totalorder %s30, 0
      %p196 = por %p194, %p195
      %p197 = scmp.ne.s32.totalorder %s183, %s184
      %p198 = scmp.eq.s32.totalorder %s31, 3
      %p199 = por %p197, %p198
      %p201 = scmp.ne.s32.totalorder %s184, %s200
      %p202 = scmp.eq.s32.totalorder %s31, 0
      %p203 = por %p201, %p202
      %s204 = ssub.s32 %s32, %s44
      %p205 = scmp.eq.s32.totalorder %s204, 0
      %s207 = sadd.s32 %s206, 1
      %s208 = scalar_select %p205, %s206, %s207
      %p211 = pneg %p205
      %p212 = scmp.eq.s32.totalorder %s25, 3
      %p213 = por %p211, %p212
      %p214 = scmp.ne.s32.totalorder %s206, %s209
      %p215 = scmp.eq.s32.totalorder %s25, 0
      %p216 = por %p214, %p215
      %p217 = scmp.ne.s32.totalorder %s206, %s209
      %p218 = scmp.eq.s32.totalorder %s30, 3
      %p219 = por %p217, %p218
      %p220 = scmp.ne.s32.totalorder %s209, %s210
      %p221 = scmp.eq.s32.totalorder %s30, 0
      %p222 = por %p220, %p221
      %p223 = scmp.ne.s32.totalorder %s209, %s210
      %p224 = scmp.eq.s32.totalorder %s31, 3
      %p225 = por %p223, %p224
      %p227 = scmp.ne.s32.totalorder %s210, %s226
      %p228 = scmp.eq.s32.totalorder %s31, 0
      %p229 = por %p227, %p228
      %p230 = scmp.le.s32.totalorder 1, %s25
      %p231 = scmp.lt.s32.totalorder %s25, 5
      %p232 = pnand %p230, %p231
      %p233 = pneg %p232
      // Predicated region
      $region9: #{tpu_custom_call.1} parent=5 // pred_check
        _
      $region10: #{tpu_custom_call.1} parent=5 // pred_check_branch
        %235 = sbr.rel (%p232) target = $region12
      $region11: #{tpu_custom_call.1} parent=5 // pred_region
        %s236 = ssub.s32 %s25, 1
        // Predicated region
        $region13: #{tpu_custom_call.1} parent=11 // pred_check
          %p237 = pneg %p86
        $region14: #{tpu_custom_call.1} parent=11 // pred_check_branch
          %239 = sbr.rel (%p237) target = $region16
        $region15: #{tpu_custom_call.1} parent=11 // pred_region
          %s241 = ssub.s32 256, 256
          %242 = vsyncadd [#allocation8], %s241
          %s243 = sshll.u32 [#allocation7], 4
          %s244 = int_to_ptr.vmem [resolvable:$true] %s243
          %249 = dma.hbm_to_vmem [thread:$0]  %s1, 256, %s244, [#allocation8], 128, 128, 8
        $region16: #{tpu_custom_call.1} parent=11 // pred_fallthru
          _
        // Predicated region
        $region17: #{tpu_custom_call.1} parent=11 // pred_check
          %p250 = pneg %p107
        $region18: #{tpu_custom_call.1} parent=11 // pred_check_branch
          %252 = sbr.rel (%p250) target = $region20
        $region19: #{tpu_custom_call.1} parent=11 // pred_region
          %s254 = ssub.s32 256, 256
          %255 = vsyncadd [#allocation8], %s254
          %s256 = sshll.u32 [#allocation9], 4
          %s257 = int_to_ptr.vmem [resolvable:$true] %s256
          %262 = dma.hbm_to_vmem [thread:$0]  %s2, 256, %s257, [#allocation8], 128, 128, 8
        $region20: #{tpu_custom_call.1} parent=11 // pred_fallthru
          _
        // Predicated region
        $region21: #{tpu_custom_call.1} parent=11 // pred_check
          %p263 = pneg %p128
        $region22: #{tpu_custom_call.1} parent=11 // pred_check_branch
          %265 = sbr.rel (%p263) target = $region24
        $region23: #{tpu_custom_call.1} parent=11 // pred_region
          _
        $region24: #{tpu_custom_call.1} parent=11 // pred_fallthru
          _
        // Predicated region
        $region25: #{tpu_custom_call.1} parent=11 // pred_check
          %p266 = pneg %p149
        $region26: #{tpu_custom_call.1} parent=11 // pred_check_branch
          %268 = sbr.rel (%p266) target = $region28
        $region27: #{tpu_custom_call.1} parent=11 // pred_region
          %s270 = ssub.s32 2048, 2048
          %271 = vsyncadd [#allocation11], %s270
          %s272 = sshll.u32 [#allocation10], 4
          %s273 = int_to_ptr.vmem [resolvable:$true] %s272
          %278 = dma.hbm_to_vmem [thread:$0]  %s4, 2048, %s273, [#allocation11], 128, 128, 8
        $region28: #{tpu_custom_call.1} parent=11 // pred_fallthru
          _
        // Predicated region
        $region29: #{tpu_custom_call.1} parent=11 // pred_check
          %p279 = pneg %p170
        $region30: #{tpu_custom_call.1} parent=11 // pred_check_branch
          %281 = sbr.rel (%p279) target = $region32
        $region31: #{tpu_custom_call.1} parent=11 // pred_region
          _
        $region32: #{tpu_custom_call.1} parent=11 // pred_fallthru
          _
      $region12: #{tpu_custom_call.1} parent=5 // pred_fallthru
        _
      %p282 = scmp.lt.s32.totalorder %s25, 4
      // Predicated region
      $region33: #{tpu_custom_call.1} parent=5 // pred_check
        %p283 = pneg %p282
      $region34: #{tpu_custom_call.1} parent=5 // pred_check_branch
        %285 = sbr.rel (%p283) target = $region36
      $region35: #{tpu_custom_call.1} parent=5 // pred_region
        // Predicated region
        $region37: #{tpu_custom_call.1} parent=35 // pred_check
          %p286 = pneg %p59
        $region38: #{tpu_custom_call.1} parent=35 // pred_check_branch
          %288 = sbr.rel (%p286) target = $region40
        $region39: #{tpu_custom_call.1} parent=35 // pred_region
          %s289 = sand.u32 %s49, 1
          %s290 = scalar_lea.sflag [#allocation5], %s289
          %s291 = sand.u32 %s49, 1
          %s292 = smul.addr %s291, 16
          %s293 = scalar_lea.vmem [#allocation4], %s292
          %s295 = ssub.s32 256, 256
          %296 = vsyncadd %s290, %s295
          %s297 = smul.addr %s32, 4
          %s298 = sadd.s32 %s33, %s297
          %s299 = smul.addr %s298, 128
          %s300 = scalar_lea.hbm %s0, %s299
          %s301 = sshll.u32 %s293, 4
          %s302 = int_to_ptr.vmem [resolvable:$true] %s301
          %307 = dma.hbm_to_vmem [thread:$0]  %s300, 256, %s302, %s290, 256, 128, 8
        $region40: #{tpu_custom_call.1} parent=35 // pred_fallthru
          _
      $region36: #{tpu_custom_call.1} parent=5 // pred_fallthru
        _
      %p308 = scmp.le.s32.totalorder 1, %s25
      %p309 = scmp.lt.s32.totalorder %s25, 5
      %p310 = pnand %p308, %p309
      %p311 = pneg %p310
      // Predicated region
      $region41: #{tpu_custom_call.1} parent=5 // pred_check
        _
      $region42: #{tpu_custom_call.1} parent=5 // pred_check_branch
        %313 = sbr.rel (%p310) target = $region44
      $region43: #{tpu_custom_call.1} parent=5 // pred_region
        %s314 = ssub.s32 %s25, 1
        %s315 = sand.u32 %s52, 1
        %s316 = scalar_lea.sflag [#allocation5], %s315
        %s317 = sand.u32 %s52, 1
        %s318 = smul.addr %s317, 16
        %s319 = scalar_lea.vmem [#allocation4], %s318
        // Predicated region
        $region45: #{tpu_custom_call.1} parent=43 // pred_check
          %p320 = pneg %p65
        $region46: #{tpu_custom_call.1} parent=43 // pred_check_branch
          %322 = sbr.rel (%p320) target = $region48
        $region47: #{tpu_custom_call.1} parent=43 // pred_region
          %323 = dma.done %s316, 256
        $region48: #{tpu_custom_call.1} parent=43 // pred_fallthru
          _
        // Predicated region
        $region49: #{tpu_custom_call.1} parent=43 // pred_check
          %p324 = pneg %p86
        $region50: #{tpu_custom_call.1} parent=43 // pred_check_branch
          %326 = sbr.rel (%p324) target = $region52
        $region51: #{tpu_custom_call.1} parent=43 // pred_region
          %327 = dma.done [#allocation8], 256
        $region52: #{tpu_custom_call.1} parent=43 // pred_fallthru
          _
        // Predicated region
        $region53: #{tpu_custom_call.1} parent=43 // pred_check
          %p328 = pneg %p107
        $region54: #{tpu_custom_call.1} parent=43 // pred_check_branch
          %330 = sbr.rel (%p328) target = $region56
        $region55: #{tpu_custom_call.1} parent=43 // pred_region
          %331 = dma.done [#allocation8], 256
        $region56: #{tpu_custom_call.1} parent=43 // pred_fallthru
          _
        // Predicated region
        $region57: #{tpu_custom_call.1} parent=43 // pred_check
          %p332 = pneg %p149
        $region58: #{tpu_custom_call.1} parent=43 // pred_check_branch
          %334 = sbr.rel (%p332) target = $region60
        $region59: #{tpu_custom_call.1} parent=43 // pred_region
          %335 = dma.done [#allocation11], 2048
        $region60: #{tpu_custom_call.1} parent=43 // pred_fallthru
          _
        %s336 = sand.u32 %s52, 1
        %s337 = scalar_lea.sflag [#allocation5], %s336
        %s338 = sand.u32 %s52, 1
        %s339 = smul.addr %s338, 16
        %s340 = scalar_lea.vmem [#allocation4], %s339
        %p341 = pneg %p65
        %p342 = pneg %p62
        %p343 = pneg %p86
        %p344 = pneg %p83
        %p345 = pneg %p107
        %p346 = pneg %p104
        %p347 = pneg %p128
        %p348 = pneg %p125
        %p349 = pneg %p149
        %p350 = pneg %p146
        %p351 = pneg %p170
        %p352 = pneg %p167
        %p353 = pneg %p196
        %p354 = pneg %p193
        %s355 = sand.u32 %s183, 1
        %s356 = scalar_lea.sflag [#allocation6], %s355
        %s357 = sand.u32 %s183, 1
        %s358 = scalar_lea.vmem [#allocation12], %s357
        %p359 = pneg %p222
        %p360 = pneg %p219
        %s361 = sand.u32 %s209, 1
        %s362 = scalar_lea.sflag [#allocation14], %s361
        %s363 = sand.u32 %s209, 1
        %s364 = scalar_lea.vmem [#allocation13], %s363
        %p365 = scmp.eq.s32.totalorder %s35, 0
        // Predicated region
        $region61: #{tpu_custom_call.1} parent=43 // pred_check
          %p366 = pneg %p365
        $region62: #{tpu_custom_call.1} parent=43 // pred_check_branch
          %368 = sbr.rel (%p366) target = $region64
        $region63: #{tpu_custom_call.1} parent=43 // pred_region
          %vm369 = vcmask 122880
          %370 = vst.msk [vmem:[#allocation2] sm:$0x1] %vm369, 0.0
          %371 = vst.msk [vmem:[#allocation3] sm:$0x1] %vm369, 0.0
        $region64: #{tpu_custom_call.1} parent=43 // pred_fallthru
          _
        %v372 = vld [vmem:[%s319] sm:$0xff]
        %v373 = vld [vmem:[%s319 + $0x8] sm:$0xff]
        %374 = vadd.xlane.f32.xlu0 %v372
        %v375 = vpop.xlane.xlu0 %374
        %376 = vadd.xlane.f32.xlu0 %v373
        %v377 = vpop.xlane.xlu0 %376
        %v378 = vmul.f32 %v372, %v372
        %v379 = vmul.f32 %v373, %v373
        %380 = vadd.xlane.f32.xlu0 %v378
        %v381 = vpop.xlane.xlu0 %380
        %382 = vadd.xlane.f32.xlu0 %v379
        %v383 = vpop.xlane.xlu0 %382
        %s384 = smul.u32 %s35, 128
        %s385 = scvt.s32.f32 %s384
        %s386 = sadd.f32 %s385, 128.0
        %v387 = vmul.f32 %v375, 0.0078125
        %v388 = vmul.f32 %v377, 0.0078125
        %v389 = vmul.f32 %v375, %v387
        %v390 = vmul.f32 %v377, %v388
        %v391 = vsub.f32 %v381, %v389
        %v392 = vsub.f32 %v383, %v390
        %v393 = vld [vmem:[#allocation2] sm:$0x1]
        %v395 = vlaneseq
        %v396 = vshrl.u32 %v395, 7
        %v397 = vsub.s32 0, %v396
        %v398 = vrot.slane %v393, %v397
        %400 = vbcast.lane.b32.xlu0 %v398, 256
        %v401 = vpop.permute.xlu0 %400
        %s403 = sor.u32 256, 8
        %404 = vbcast.lane.b32.xlu0 %v398, %s403
        %v405 = vpop.permute.xlu0 %404
        %v408 = vsub.f32 %v387, %v401
        %v409 = vsub.f32 %v388, %v405
        %v410 = vstv %s386
        %v411 = vrcp.pop %v410
        %s412 = vtos %v411
        %s413 = smul.f32 128.0, %s412
        %v414 = vstv %s413
        %v415 = vmul.f32 %v408, %v414
        %v416 = vmul.f32 %v409, %v414
        %v419 = vcombine.high %v415, %v415
        %v421 = vunpack.c.l.s4 1966171168
        %v422 = vunpack.c.0.s8 %v421
        %v423 = vlaneseq
        %v424 = vshrl.u32 %v423, 7
        %v425 = vsub.s32 %v422, %v424
        %v426 = vrot.slane %v415, %v425
        %v428 = vunpack.c.l.s4 1966171168
        %v429 = vunpack.c.0.s8 %v428
        %v430 = vlaneseq
        %v431 = vshrl.u32 %v430, 7
        %v432 = vsub.s32 %v429, %v431
        %v433 = vrot.slane %v419, %v432
        %v434 = vcombine.high %v426, %v426
        %v435 = vcombine.high %v433, %v433
        %v437 = vunpack.c.l.s4 1966171168
        %v438 = vunpack.c.0.s8 %v437
        %v439 = vlaneseq
        %v440 = vshrl.u32 %v439, 7
        %v441 = vsub.s32 %v438, %v440
        %v442 = vrot.slane %v426, %v441
        %v444 = vunpack.c.l.s4 1966171168
        %v445 = vunpack.c.0.s8 %v444
        %v446 = vlaneseq
        %v447 = vshrl.u32 %v446, 7
        %v448 = vsub.s32 %v445, %v447
        %v449 = vrot.slane %v433, %v448
        %v451 = vunpack.c.l.s4 1966171168
        %v452 = vunpack.c.0.s8 %v451
        %v453 = vlaneseq
        %v454 = vshrl.u32 %v453, 7
        %v455 = vsub.s32 %v452, %v454
        %v456 = vrot.slane %v434, %v455
        %v458 = vunpack.c.l.s4 1966171168
        %v459 = vunpack.c.0.s8 %v458
        %v460 = vlaneseq
        %v461 = vshrl.u32 %v460, 7
        %v462 = vsub.s32 %v459, %v461
        %v463 = vrot.slane %v435, %v462
        %v464 = vcombine.high %v442, %v442
        %v465 = vcombine.high %v449, %v449
        %v466 = vcombine.high %v456, %v456
        %v467 = vcombine.high %v463, %v463
        %v468 = vcombine.high %v416, %v416
        %v470 = vunpack.c.l.s4 1966171168
        %v471 = vunpack.c.0.s8 %v470
        %v472 = vlaneseq
        %v473 = vshrl.u32 %v472, 7
        %v474 = vsub.s32 %v471, %v473
        %v475 = vrot.slane %v416, %v474
        %v477 = vunpack.c.l.s4 1966171168
        %v478 = vunpack.c.0.s8 %v477
        %v479 = vlaneseq
        %v480 = vshrl.u32 %v479, 7
        %v481 = vsub.s32 %v478, %v480
        %v482 = vrot.slane %v468, %v481
        %v483 = vcombine.high %v475, %v475
        %v484 = vcombine.high %v482, %v482
        %v486 = vunpack.c.l.s4 1966171168
        %v487 = vunpack.c.0.s8 %v486
        %v488 = vlaneseq
        %v489 = vshrl.u32 %v488, 7
        %v490 = vsub.s32 %v487, %v489
        %v491 = vrot.slane %v475, %v490
        %v493 = vunpack.c.l.s4 1966171168
        %v494 = vunpack.c.0.s8 %v493
        %v495 = vlaneseq
        %v496 = vshrl.u32 %v495, 7
        %v497 = vsub.s32 %v494, %v496
        %v498 = vrot.slane %v482, %v497
        %v500 = vunpack.c.l.s4 1966171168
        %v501 = vunpack.c.0.s8 %v500
        %v502 = vlaneseq
        %v503 = vshrl.u32 %v502, 7
        %v504 = vsub.s32 %v501, %v503
        %v505 = vrot.slane %v483, %v504
        %v507 = vunpack.c.l.s4 1966171168
        %v508 = vunpack.c.0.s8 %v507
        %v509 = vlaneseq
        %v510 = vshrl.u32 %v509, 7
        %v511 = vsub.s32 %v508, %v510
        %v512 = vrot.slane %v484, %v511
        %v513 = vcombine.high %v491, %v491
        %v514 = vcombine.high %v498, %v498
        %v515 = vcombine.high %v505, %v505
        %v516 = vcombine.high %v512, %v512
        %v517 = vcombine.low %v442, %v456
        %v518 = vcombine.low %v464, %v466
        %v519 = vcombine.low %v449, %v463
        %v520 = vcombine.low %v465, %v467
        %v522 = vunpack.c.l.s4 1966171168
        %v523 = vunpack.c.0.s8 %v522
        %v524 = vlaneseq
        %v525 = vshrl.u32 %v524, 7
        %v526 = vsub.s32 %v523, %v525
        %v527 = vrot.slane %v517, %v526
        %v529 = vunpack.c.l.s4 1966171168
        %v530 = vunpack.c.0.s8 %v529
        %v531 = vlaneseq
        %v532 = vshrl.u32 %v531, 7
        %v533 = vsub.s32 %v530, %v532
        %v534 = vrot.slane %v518, %v533
        %v536 = vunpack.c.l.s4 1966171168
        %v537 = vunpack.c.0.s8 %v536
        %v538 = vlaneseq
        %v539 = vshrl.u32 %v538, 7
        %v540 = vsub.s32 %v537, %v539
        %v541 = vrot.slane %v519, %v540
        %v543 = vunpack.c.l.s4 1966171168
        %v544 = vunpack.c.0.s8 %v543
        %v545 = vlaneseq
        %v546 = vshrl.u32 %v545, 7
        %v547 = vsub.s32 %v544, %v546
        %v548 = vrot.slane %v520, %v547
        %v549 = vcombine.low %v527, %v534
        %v550 = vcombine.low %v541, %v548
        %v552 = vunpack.c.l.s4 1966171168
        %v553 = vunpack.c.0.s8 %v552
        %v554 = vlaneseq
        %v555 = vshrl.u32 %v554, 7
        %v556 = vsub.s32 %v553, %v555
        %v557 = vrot.slane %v549, %v556
        %v559 = vunpack.c.l.s4 1966171168
        %v560 = vunpack.c.0.s8 %v559
        %v561 = vlaneseq
        %v562 = vshrl.u32 %v561, 7
        %v563 = vsub.s32 %v560, %v562
        %v564 = vrot.slane %v550, %v563
        %v565 = vcombine.low %v557, %v564
        %v566 = vcombine.low %v491, %v505
        %v567 = vcombine.low %v513, %v515
        %v568 = vcombine.low %v498, %v512
        %v569 = vcombine.low %v514, %v516
        %v571 = vunpack.c.l.s4 1966171168
        %v572 = vunpack.c.0.s8 %v571
        %v573 = vlaneseq
        %v574 = vshrl.u32 %v573, 7
        %v575 = vsub.s32 %v572, %v574
        %v576 = vrot.slane %v566, %v575
        %v578 = vunpack.c.l.s4 1966171168
        %v579 = vunpack.c.0.s8 %v578
        %v580 = vlaneseq
        %v581 = vshrl.u32 %v580, 7
        %v582 = vsub.s32 %v579, %v581
        %v583 = vrot.slane %v567, %v582
        %v585 = vunpack.c.l.s4 1966171168
        %v586 = vunpack.c.0.s8 %v585
        %v587 = vlaneseq
        %v588 = vshrl.u32 %v587, 7
        %v589 = vsub.s32 %v586, %v588
        %v590 = vrot.slane %v568, %v589
        %v592 = vunpack.c.l.s4 1966171168
        %v593 = vunpack.c.0.s8 %v592
        %v594 = vlaneseq
        %v595 = vshrl.u32 %v594, 7
        %v596 = vsub.s32 %v593, %v595
        %v597 = vrot.slane %v569, %v596
        %v598 = vcombine.low %v576, %v583
        %v599 = vcombine.low %v590, %v597
        %v601 = vunpack.c.l.s4 1966171168
        %v602 = vunpack.c.0.s8 %v601
        %v603 = vlaneseq
        %v604 = vshrl.u32 %v603, 7
        %v605 = vsub.s32 %v602, %v604
        %v606 = vrot.slane %v598, %v605
        %v608 = vunpack.c.l.s4 1966171168
        %v609 = vunpack.c.0.s8 %v608
        %v610 = vlaneseq
        %v611 = vshrl.u32 %v610, 7
        %v612 = vsub.s32 %v609, %v611
        %v613 = vrot.slane %v599, %v612
        %v614 = vcombine.low %v606, %v613
        %615 = vset.pattern.permute.xlu0 0
        %616 = vperm.xlu0 %615, %v565
        %v617 = vpop.permute.xlu0 %616
        %618 = vset.pattern.permute.xlu0 0
        %619 = vperm.xlu0 %618, %v614
        %v620 = vpop.permute.xlu0 %619
        %v621 = vlaneseq
        %v622 = vand.u32 %v621, 127
        %v623 = vlaneseq
        %v624 = vshrl.u32 %v623, 7
        %v625 = vsub.s32 %v622, %v624
        %v626 = vrot.slane %v617, %v625
        %v627 = vadd.s32 %v622, 4294967288
        %v628 = vlaneseq
        %v629 = vshrl.u32 %v628, 7
        %v630 = vsub.s32 %v627, %v629
        %v631 = vrot.slane %v620, %v630
        %vm632 = vcmask 130112
        %v633 = vsel %vm632, %v631, %v626
        %v635 = vunpack.c.l.s4 1966171168
        %v636 = vunpack.c.0.s8 %v635
        %v637 = vlaneseq
        %v638 = vshrl.u32 %v637, 7
        %v639 = vsub.s32 %v636, %v638
        %v640 = vrot.slane %v633, %v639
        %v642 = vunpack.c.l.s4 1966171168
        %v643 = vunpack.c.0.s8 %v642
        %v644 = vlaneseq
        %v645 = vshrl.u32 %v644, 7
        %v646 = vsub.s32 %v643, %v645
        %v647 = vrot.slane %v640, %v646
        %v649 = vadd.f32 %v393, %v647
        %vm650 = vcmask 122880
        %651 = vst.msk [vmem:[#allocation2] sm:$0x1] %vm650, %v649
        %v652 = vld [vmem:[#allocation3] sm:$0x1]
        %v653 = vmul.f32 %v408, %v408
        %v654 = vmul.f32 %v409, %v409
        %s655 = smul.f32 %s385, 128.0
        %v656 = vstv %s386
        %v657 = vrcp.pop %v656
        %s658 = vtos %v657
        %s659 = smul.f32 %s655, %s658
        %v660 = vstv %s659
        %v661 = vmul.f32 %v653, %v660
        %v662 = vmul.f32 %v654, %v660
        %v663 = vadd.f32 %v391, %v661
        %v664 = vadd.f32 %v392, %v662
        %v667 = vcombine.high %v663, %v663
        %v669 = vunpack.c.l.s4 1966171168
        %v670 = vunpack.c.0.s8 %v669
        %v671 = vlaneseq
        %v672 = vshrl.u32 %v671, 7
        %v673 = vsub.s32 %v670, %v672
        %v674 = vrot.slane %v663, %v673
        %v676 = vunpack.c.l.s4 1966171168
        %v677 = vunpack.c.0.s8 %v676
        %v678 = vlaneseq
        %v679 = vshrl.u32 %v678, 7
        %v680 = vsub.s32 %v677, %v679
        %v681 = vrot.slane %v667, %v680
        %v682 = vcombine.high %v674, %v674
        %v683 = vcombine.high %v681, %v681
        %v685 = vunpack.c.l.s4 1966171168
        %v686 = vunpack.c.0.s8 %v685
        %v687 = vlaneseq
        %v688 = vshrl.u32 %v687, 7
        %v689 = vsub.s32 %v686, %v688
        %v690 = vrot.slane %v674, %v689
        %v692 = vunpack.c.l.s4 1966171168
        %v693 = vunpack.c.0.s8 %v692
        %v694 = vlaneseq
        %v695 = vshrl.u32 %v694, 7
        %v696 = vsub.s32 %v693, %v695
        %v697 = vrot.slane %v681, %v696
        %v699 = vunpack.c.l.s4 1966171168
        %v700 = vunpack.c.0.s8 %v699
        %v701 = vlaneseq
        %v702 = vshrl.u32 %v701, 7
        %v703 = vsub.s32 %v700, %v702
        %v704 = vrot.slane %v682, %v703
        %v706 = vunpack.c.l.s4 1966171168
        %v707 = vunpack.c.0.s8 %v706
        %v708 = vlaneseq
        %v709 = vshrl.u32 %v708, 7
        %v710 = vsub.s32 %v707, %v709
        %v711 = vrot.slane %v683, %v710
        %v712 = vcombine.high %v690, %v690
        %v713 = vcombine.high %v697, %v697
        %v714 = vcombine.high %v704, %v704
        %v715 = vcombine.high %v711, %v711
        %v716 = vcombine.high %v664, %v664
        %v718 = vunpack.c.l.s4 1966171168
        %v719 = vunpack.c.0.s8 %v718
        %v720 = vlaneseq
        %v721 = vshrl.u32 %v720, 7
        %v722 = vsub.s32 %v719, %v721
        %v723 = vrot.slane %v664, %v722
        %v725 = vunpack.c.l.s4 1966171168
        %v726 = vunpack.c.0.s8 %v725
        %v727 = vlaneseq
        %v728 = vshrl.u32 %v727, 7
        %v729 = vsub.s32 %v726, %v728
        %v730 = vrot.slane %v716, %v729
        %v731 = vcombine.high %v723, %v723
        %v732 = vcombine.high %v730, %v730
        %v734 = vunpack.c.l.s4 1966171168
        %v735 = vunpack.c.0.s8 %v734
        %v736 = vlaneseq
        %v737 = vshrl.u32 %v736, 7
        %v738 = vsub.s32 %v735, %v737
        %v739 = vrot.slane %v723, %v738
        %v741 = vunpack.c.l.s4 1966171168
        %v742 = vunpack.c.0.s8 %v741
        %v743 = vlaneseq
        %v744 = vshrl.u32 %v743, 7
        %v745 = vsub.s32 %v742, %v744
        %v746 = vrot.slane %v730, %v745
        %v748 = vunpack.c.l.s4 1966171168
        %v749 = vunpack.c.0.s8 %v748
        %v750 = vlaneseq
        %v751 = vshrl.u32 %v750, 7
        %v752 = vsub.s32 %v749, %v751
        %v753 = vrot.slane %v731, %v752
        %v755 = vunpack.c.l.s4 1966171168
        %v756 = vunpack.c.0.s8 %v755
        %v757 = vlaneseq
        %v758 = vshrl.u32 %v757, 7
        %v759 = vsub.s32 %v756, %v758
        %v760 = vrot.slane %v732, %v759
        %v761 = vcombine.high %v739, %v739
        %v762 = vcombine.high %v746, %v746
        %v763 = vcombine.high %v753, %v753
        %v764 = vcombine.high %v760, %v760
        %v765 = vcombine.low %v690, %v704
        %v766 = vcombine.low %v712, %v714
        %v767 = vcombine.low %v697, %v711
        %v768 = vcombine.low %v713, %v715
        %v770 = vunpack.c.l.s4 1966171168
        %v771 = vunpack.c.0.s8 %v770
        %v772 = vlaneseq
        %v773 = vshrl.u32 %v772, 7
        %v774 = vsub.s32 %v771, %v773
        %v775 = vrot.slane %v765, %v774
        %v777 = vunpack.c.l.s4 1966171168
        %v778 = vunpack.c.0.s8 %v777
        %v779 = vlaneseq
        %v780 = vshrl.u32 %v779, 7
        %v781 = vsub.s32 %v778, %v780
        %v782 = vrot.slane %v766, %v781
        %v784 = vunpack.c.l.s4 1966171168
        %v785 = vunpack.c.0.s8 %v784
        %v786 = vlaneseq
        %v787 = vshrl.u32 %v786, 7
        %v788 = vsub.s32 %v785, %v787
        %v789 = vrot.slane %v767, %v788
        %v791 = vunpack.c.l.s4 1966171168
        %v792 = vunpack.c.0.s8 %v791
        %v793 = vlaneseq
        %v794 = vshrl.u32 %v793, 7
        %v795 = vsub.s32 %v792, %v794
        %v796 = vrot.slane %v768, %v795
        %v797 = vcombine.low %v775, %v782
        %v798 = vcombine.low %v789, %v796
        %v800 = vunpack.c.l.s4 1966171168
        %v801 = vunpack.c.0.s8 %v800
        %v802 = vlaneseq
        %v803 = vshrl.u32 %v802, 7
        %v804 = vsub.s32 %v801, %v803
        %v805 = vrot.slane %v797, %v804
        %v807 = vunpack.c.l.s4 1966171168
        %v808 = vunpack.c.0.s8 %v807
        %v809 = vlaneseq
        %v810 = vshrl.u32 %v809, 7
        %v811 = vsub.s32 %v808, %v810
        %v812 = vrot.slane %v798, %v811
        %v813 = vcombine.low %v805, %v812
        %v814 = vcombine.low %v739, %v753
        %v815 = vcombine.low %v761, %v763
        %v816 = vcombine.low %v746, %v760
        %v817 = vcombine.low %v762, %v764
        %v819 = vunpack.c.l.s4 1966171168
        %v820 = vunpack.c.0.s8 %v819
        %v821 = vlaneseq
        %v822 = vshrl.u32 %v821, 7
        %v823 = vsub.s32 %v820, %v822
        %v824 = vrot.slane %v814, %v823
        %v826 = vunpack.c.l.s4 1966171168
        %v827 = vunpack.c.0.s8 %v826
        %v828 = vlaneseq
        %v829 = vshrl.u32 %v828, 7
        %v830 = vsub.s32 %v827, %v829
        %v831 = vrot.slane %v815, %v830
        %v833 = vunpack.c.l.s4 1966171168
        %v834 = vunpack.c.0.s8 %v833
        %v835 = vlaneseq
        %v836 = vshrl.u32 %v835, 7
        %v837 = vsub.s32 %v834, %v836
        %v838 = vrot.slane %v816, %v837
        %v840 = vunpack.c.l.s4 1966171168
        %v841 = vunpack.c.0.s8 %v840
        %v842 = vlaneseq
        %v843 = vshrl.u32 %v842, 7
        %v844 = vsub.s32 %v841, %v843
        %v845 = vrot.slane %v817, %v844
        %v846 = vcombine.low %v824, %v831
        %v847 = vcombine.low %v838, %v845
        %v849 = vunpack.c.l.s4 1966171168
        %v850 = vunpack.c.0.s8 %v849
        %v851 = vlaneseq
        %v852 = vshrl.u32 %v851, 7
        %v853 = vsub.s32 %v850, %v852
        %v854 = vrot.slane %v846, %v853
        %v856 = vunpack.c.l.s4 1966171168
        %v857 = vunpack.c.0.s8 %v856
        %v858 = vlaneseq
        %v859 = vshrl.u32 %v858, 7
        %v860 = vsub.s32 %v857, %v859
        %v861 = vrot.slane %v847, %v860
        %v862 = vcombine.low %v854, %v861
        %863 = vset.pattern.permute.xlu0 0
        %864 = vperm.xlu0 %863, %v813
        %v865 = vpop.permute.xlu0 %864
        %866 = vset.pattern.permute.xlu0 0
        %867 = vperm.xlu0 %866, %v862
        %v868 = vpop.permute.xlu0 %867
        %v869 = vlaneseq
        %v870 = vshrl.u32 %v869, 7
        %v871 = vsub.s32 %v622, %v870
        %v872 = vrot.slane %v865, %v871
        %v873 = vlaneseq
        %v874 = vshrl.u32 %v873, 7
        %v875 = vsub.s32 %v627, %v874
        %v876 = vrot.slane %v868, %v875
        %v877 = vsel %vm632, %v876, %v872
        %v879 = vunpack.c.l.s4 1966171168
        %v880 = vunpack.c.0.s8 %v879
        %v881 = vlaneseq
        %v882 = vshrl.u32 %v881, 7
        %v883 = vsub.s32 %v880, %v882
        %v884 = vrot.slane %v877, %v883
        %v886 = vunpack.c.l.s4 1966171168
        %v887 = vunpack.c.0.s8 %v886
        %v888 = vlaneseq
        %v889 = vshrl.u32 %v888, 7
        %v890 = vsub.s32 %v887, %v889
        %v891 = vrot.slane %v884, %v890
        %v893 = vadd.f32 %v652, %v891
        %894 = vst.msk [vmem:[#allocation3] sm:$0x1] %vm650, %v893
        %p895 = scmp.eq.s32.totalorder %s35, 1
        // Predicated region
        $region65: #{tpu_custom_call.1} parent=43 // pred_check
          %p896 = pneg %p895
        $region66: #{tpu_custom_call.1} parent=43 // pred_check_branch
          %898 = sbr.rel (%p896) target = $region68
        $region67: #{tpu_custom_call.1} parent=43 // pred_region
          %v899 = vld [vmem:[#allocation2] sm:$0x1]
          %v900 = vld [vmem:[#allocation3] sm:$0x1]
          %v901 = vmul.f32 %v900, 0.003921569
          %v902 = vmax.f32 %v901, 0.0
          %v903 = vrsqrt.pop %v902
          %v904 = vmul.f32 %v902, %v903
          %vm905 = vcmp.eq.f32.partialorder %v902, inf
          %v906 = vsel %vm905, %v902, %v904
          %vm907 = vcmp.eq.f32.partialorder %v902, 0.0
          %v908 = vand.u32 %v902, 2147483648
          %v909 = vsel %vm907, %v908, %v906
          %v910 = vld [vmem:[#allocation7] sm:$0xff]
          %v911 = vld [vmem:[#allocation7 + $0x8] sm:$0xff]
          %v912 = vld [vmem:[#allocation9] sm:$0xff]
          %v913 = vld [vmem:[#allocation9 + $0x8] sm:$0xff]
          %vm914 = vcmask 130048
          %v916 = vsel %vm914, %v909, 0
          %918 = vmatprep.subr.mxu0 0.0
          %919 = vmatpush1.msra.mxu0 0.0
          %920 = vmatprep.subr.mxu0 0.0
          %921 = vmatpush1.msra.mxu0 0.0
          %922 = vmatprep.subr.mxu0 0.0
          %923 = vmatpush1.msra.mxu0 0.0
          %924 = vmatprep.subr.mxu0 0.0
          %925 = vmatpush1.msra.mxu0 0.0
          %926 = vmatprep.subr.mxu0 0.0
          %927 = vmatpush1.msra.mxu0 0.0
          %928 = vmatprep.subr.mxu0 0.0
          %929 = vmatpush1.msra.mxu0 0.0
          %930 = vmatprep.subr.mxu0 0.0
          %931 = vmatpush1.msra.mxu0 0.0
          %932 = vmatprep.subr.mxu0 0.0
          %933 = vmatpush1.msra.mxu0 0.0
          %934 = vmatprep.subr.mxu0 0.0
          %935 = vmatpush1.msra.mxu0 0.0
          %936 = vmatprep.subr.mxu0 0.0
          %937 = vmatpush1.msra.mxu0 0.0
          %938 = vmatprep.subr.mxu0 0.0
          %939 = vmatpush1.msra.mxu0 0.0
          %940 = vmatprep.subr.mxu0 0.0
          %941 = vmatpush1.msra.mxu0 0.0
          %942 = vmatprep.subr.mxu0 0.0
          %943 = vmatpush1.msra.mxu0 0.0
          %944 = vmatprep.subr.mxu0 0.0
          %945 = vmatpush1.msra.mxu0 0.0
          %946 = vmatprep.subr.mxu0 0.0
          %947 = vmatpush1.msra.mxu0 %v913
          %948 = vmatprep.subr.mxu0 0.0
          %949 = vmatpush1.msra.mxu0 %v912
          %950 = vmatprep.subr.mxu0 0.0
          %951 = vmatpush2.msra.mxu0 0.0
          %952 = vmatprep.subr.mxu0 0.0
          %953 = vmatpush2.msra.mxu0 0.0
          %954 = vmatprep.subr.mxu0 0.0
          %955 = vmatpush2.msra.mxu0 0.0
          %956 = vmatprep.subr.mxu0 0.0
          %957 = vmatpush2.msra.mxu0 0.0
          %958 = vmatprep.subr.mxu0 0.0
          %959 = vmatpush2.msra.mxu0 0.0
          %960 = vmatprep.subr.mxu0 0.0
          %961 = vmatpush2.msra.mxu0 0.0
          %962 = vmatprep.subr.mxu0 0.0
          %963 = vmatpush2.msra.mxu0 0.0
          %964 = vmatprep.subr.mxu0 0.0
          %965 = vmatpush2.msra.mxu0 0.0
          %966 = vmatprep.subr.mxu0 0.0
          %967 = vmatpush2.msra.mxu0 0.0
          %968 = vmatprep.subr.mxu0 0.0
          %969 = vmatpush2.msra.mxu0 0.0
          %970 = vmatprep.subr.mxu0 0.0
          %971 = vmatpush2.msra.mxu0 0.0
          %972 = vmatprep.subr.mxu0 0.0
          %973 = vmatpush2.msra.mxu0 0.0
          %974 = vmatprep.subr.mxu0 0.0
          %975 = vmatpush2.msra.mxu0 0.0
          %976 = vmatprep.subr.mxu0 0.0
          %977 = vmatpush2.msra.mxu0 0.0
          %978 = vmatprep.subr.mxu0 0.0
          %979 = vmatpush2.msra.mxu0 0.0
          %980 = vmatprep.subr.mxu0 0.0
          %981 = vmatpush2.msra.mxu0 0.0
          %982 = vmatprep.mubr.f32.mxu0 0.0
          %983 = vmatmul.mubr.f32.gmra.mxu0 %v916
          %v984 = vpop.f32.mrf.mxu0
          %v985 = vadd.f32 0.0, %v984
          %v986 = vpop.f32.mrf.mxu0
          %987 = vdwg.mxu0
          %v989 = vsel %vm914, %v899, 0
          %991 = vmatprep.subr.mxu0 0.0
          %992 = vmatpush1.msra.mxu0 0.0
          %993 = vmatprep.subr.mxu0 0.0
          %994 = vmatpush1.msra.mxu0 0.0
          %995 = vmatprep.subr.mxu0 0.0
          %996 = vmatpush1.msra.mxu0 0.0
          %997 = vmatprep.subr.mxu0 0.0
          %998 = vmatpush1.msra.mxu0 0.0
          %999 = vmatprep.subr.mxu0 0.0
          %1000 = vmatpush1.msra.mxu0 0.0
          %1001 = vmatprep.subr.mxu0 0.0
          %1002 = vmatpush1.msra.mxu0 0.0
          %1003 = vmatprep.subr.mxu0 0.0
          %1004 = vmatpush1.msra.mxu0 0.0
          %1005 = vmatprep.subr.mxu0 0.0
          %1006 = vmatpush1.msra.mxu0 0.0
          %1007 = vmatprep.subr.mxu0 0.0
          %1008 = vmatpush1.msra.mxu0 0.0
          %1009 = vmatprep.subr.mxu0 0.0
          %1010 = vmatpush1.msra.mxu0 0.0
          %1011 = vmatprep.subr.mxu0 0.0
          %1012 = vmatpush1.msra.mxu0 0.0
          %1013 = vmatprep.subr.mxu0 0.0
          %1014 = vmatpush1.msra.mxu0 0.0
          %1015 = vmatprep.subr.mxu0 0.0
          %1016 = vmatpush1.msra.mxu0 0.0
          %1017 = vmatprep.subr.mxu0 0.0
          %1018 = vmatpush1.msra.mxu0 0.0
          %1019 = vmatprep.subr.mxu0 0.0
          %1020 = vmatpush1.msra.mxu0 %v911
          %1021 = vmatprep.subr.mxu0 0.0
          %1022 = vmatpush1.msra.mxu0 %v910
          %1023 = vmatprep.subr.mxu0 0.0
          %1024 = vmatpush2.msra.mxu0 0.0
          %1025 = vmatprep.subr.mxu0 0.0
          %1026 = vmatpush2.msra.mxu0 0.0
          %1027 = vmatprep.subr.mxu0 0.0
          %1028 = vmatpush2.msra.mxu0 0.0
          %1029 = vmatprep.subr.mxu0 0.0
          %1030 = vmatpush2.msra.mxu0 0.0
          %1031 = vmatprep.subr.mxu0 0.0
          %1032 = vmatpush2.msra.mxu0 0.0
          %1033 = vmatprep.subr.mxu0 0.0
          %1034 = vmatpush2.msra.mxu0 0.0
          %1035 = vmatprep.subr.mxu0 0.0
          %1036 = vmatpush2.msra.mxu0 0.0
          %1037 = vmatprep.subr.mxu0 0.0
          %1038 = vmatpush2.msra.mxu0 0.0
          %1039 = vmatprep.subr.mxu0 0.0
          %1040 = vmatpush2.msra.mxu0 0.0
          %1041 = vmatprep.subr.mxu0 0.0
          %1042 = vmatpush2.msra.mxu0 0.0
          %1043 = vmatprep.subr.mxu0 0.0
          %1044 = vmatpush2.msra.mxu0 0.0
          %1045 = vmatprep.subr.mxu0 0.0
          %1046 = vmatpush2.msra.mxu0 0.0
          %1047 = vmatprep.subr.mxu0 0.0
          %1048 = vmatpush2.msra.mxu0 0.0
          %1049 = vmatprep.subr.mxu0 0.0
          %1050 = vmatpush2.msra.mxu0 0.0
          %1051 = vmatprep.subr.mxu0 0.0
          %1052 = vmatpush2.msra.mxu0 0.0
          %1053 = vmatprep.subr.mxu0 0.0
          %1054 = vmatpush2.msra.mxu0 0.0
          %1055 = vmatprep.mubr.f32.mxu0 0.0
          %1056 = vmatmul.mubr.f32.gmra.mxu0 %v989
          %v1057 = vpop.f32.mrf.mxu0
          %v1058 = vadd.f32 %v985, %v1057
          %v1059 = vpop.f32.mrf.mxu0
          %1060 = vdwg.mxu0
          %v1061 = vld [vmem:[%s3] sm:$0x1]
          %v1062 = vadd.f32 %v1058, %v1061
          %1063 = vst [vmem:[%s364] sm:$0x1] %v1062
          %v1064 = vmax.f32 %v1062, 0.0
          %v1065 = vld [vmem:[#allocation10] sm:$0xff]
          %v1066 = vld [vmem:[#allocation10 + $0x8] sm:$0xff]
          %v1067 = vld [vmem:[#allocation10 + $0x10] sm:$0xff]
          %v1068 = vld [vmem:[#allocation10 + $0x18] sm:$0xff]
          %v1069 = vld [vmem:[#allocation10 + $0x20] sm:$0xff]
          %v1070 = vld [vmem:[#allocation10 + $0x28] sm:$0xff]
          %v1071 = vld [vmem:[#allocation10 + $0x30] sm:$0xff]
          %v1072 = vld [vmem:[#allocation10 + $0x38] sm:$0xff]
          %v1073 = vld [vmem:[#allocation10 + $0x40] sm:$0xff]
          %v1074 = vld [vmem:[#allocation10 + $0x48] sm:$0xff]
          %v1075 = vld [vmem:[#allocation10 + $0x50] sm:$0xff]
          %v1076 = vld [vmem:[#allocation10 + $0x58] sm:$0xff]
          %v1077 = vld [vmem:[#allocation10 + $0x60] sm:$0xff]
          %v1078 = vld [vmem:[#allocation10 + $0x68] sm:$0xff]
          %v1079 = vld [vmem:[#allocation10 + $0x70] sm:$0xff]
          %v1080 = vld [vmem:[#allocation10 + $0x78] sm:$0xff]
          %v1081 = vld [vmem:[%s5] sm:$0x1]
          %1082 = vmatprep.subr.mxu0 0.0
          %1083 = vmatpush1.msra.mxu0 %v1080
          %1084 = vmatprep.subr.mxu0 0.0
          %1085 = vmatpush1.msra.mxu0 %v1079
          %1086 = vmatprep.subr.mxu0 0.0
          %1087 = vmatpush1.msra.mxu0 %v1078
          %1088 = vmatprep.subr.mxu0 0.0
          %1089 = vmatpush1.msra.mxu0 %v1077
          %1090 = vmatprep.subr.mxu0 0.0
          %1091 = vmatpush1.msra.mxu0 %v1076
          %1092 = vmatprep.subr.mxu0 0.0
          %1093 = vmatpush1.msra.mxu0 %v1075
          %1094 = vmatprep.subr.mxu0 0.0
          %1095 = vmatpush1.msra.mxu0 %v1074
          %1096 = vmatprep.subr.mxu0 0.0
          %1097 = vmatpush1.msra.mxu0 %v1073
          %1098 = vmatprep.subr.mxu0 0.0
          %1099 = vmatpush1.msra.mxu0 %v1072
          %1100 = vmatprep.subr.mxu0 0.0
          %1101 = vmatpush1.msra.mxu0 %v1071
          %1102 = vmatprep.subr.mxu0 0.0
          %1103 = vmatpush1.msra.mxu0 %v1070
          %1104 = vmatprep.subr.mxu0 0.0
          %1105 = vmatpush1.msra.mxu0 %v1069
          %1106 = vmatprep.subr.mxu0 0.0
          %1107 = vmatpush1.msra.mxu0 %v1068
          %1108 = vmatprep.subr.mxu0 0.0
          %1109 = vmatpush1.msra.mxu0 %v1067
          %1110 = vmatprep.subr.mxu0 0.0
          %1111 = vmatpush1.msra.mxu0 %v1066
          %1112 = vmatprep.subr.mxu0 0.0
          %1113 = vmatpush1.msra.mxu0 %v1065
          %1114 = vmatprep.subr.mxu0 0.0
          %1115 = vmatpush2.msra.mxu0 0.0
          %1116 = vmatprep.subr.mxu0 0.0
          %1117 = vmatpush2.msra.mxu0 0.0
          %1118 = vmatprep.subr.mxu0 0.0
          %1119 = vmatpush2.msra.mxu0 0.0
          %1120 = vmatprep.subr.mxu0 0.0
          %1121 = vmatpush2.msra.mxu0 0.0
          %1122 = vmatprep.subr.mxu0 0.0
          %1123 = vmatpush2.msra.mxu0 0.0
          %1124 = vmatprep.subr.mxu0 0.0
          %1125 = vmatpush2.msra.mxu0 0.0
          %1126 = vmatprep.subr.mxu0 0.0
          %1127 = vmatpush2.msra.mxu0 0.0
          %1128 = vmatprep.subr.mxu0 0.0
          %1129 = vmatpush2.msra.mxu0 0.0
          %1130 = vmatprep.subr.mxu0 0.0
          %1131 = vmatpush2.msra.mxu0 0.0
          %1132 = vmatprep.subr.mxu0 0.0
          %1133 = vmatpush2.msra.mxu0 0.0
          %1134 = vmatprep.subr.mxu0 0.0
          %1135 = vmatpush2.msra.mxu0 0.0
          %1136 = vmatprep.subr.mxu0 0.0
          %1137 = vmatpush2.msra.mxu0 0.0
          %1138 = vmatprep.subr.mxu0 0.0
          %1139 = vmatpush2.msra.mxu0 0.0
          %1140 = vmatprep.subr.mxu0 0.0
          %1141 = vmatpush2.msra.mxu0 0.0
          %1142 = vmatprep.subr.mxu0 0.0
          %1143 = vmatpush2.msra.mxu0 0.0
          %1144 = vmatprep.subr.mxu0 0.0
          %1145 = vmatpush2.msra.mxu0 0.0
          %1146 = vmatprep.mubr.f32.mxu0 0.0
          %1147 = vmatmul.mubr.f32.gmra.mxu0 %v1064
          %v1148 = vpop.f32.mrf.mxu0
          %v1149 = vadd.f32 %v1081, %v1148
          %v1150 = vpop.f32.mrf.mxu0
          %1151 = vdwg.mxu0
          %1152 = vst [vmem:[%s358] sm:$0x1] %v1149
        $region68: #{tpu_custom_call.1} parent=43 // pred_fallthru
          _
        %s1153 = sand.u32 %s183, 1
        %s1154 = scalar_lea.sflag [#allocation6], %s1153
        %s1155 = sand.u32 %s183, 1
        %s1156 = scalar_lea.vmem [#allocation12], %s1155
        %s1157 = sand.u32 %s209, 1
        %s1158 = scalar_lea.sflag [#allocation14], %s1157
        %s1159 = sand.u32 %s209, 1
        %s1160 = scalar_lea.vmem [#allocation13], %s1159
        // Predicated region
        $region69: #{tpu_custom_call.1} parent=43 // pred_check
          %p1161 = pneg %p193
        $region70: #{tpu_custom_call.1} parent=43 // pred_check_branch
          %1163 = sbr.rel (%p1161) target = $region72
        $region71: #{tpu_custom_call.1} parent=43 // pred_region
          %s1165 = ssub.s32 16, 16
          %1166 = vsyncadd %s1154, %s1165
          %s1167 = smul.addr %s34, 16
          %s1168 = scalar_lea.hbm %s6, %s1167
          %s1170 = sshll.u32 %s1156, 4
          %s1171 = int_to_ptr.vmem [resolvable:$true] %s1170
          %1173 = dma.vmem_to_hbm [thread:$0]  %s1171, 16, %s1168, %s1154
        $region72: #{tpu_custom_call.1} parent=43 // pred_fallthru
          _
        // Predicated region
        $region73: #{tpu_custom_call.1} parent=43 // pred_check
          %p1174 = pneg %p219
        $region74: #{tpu_custom_call.1} parent=43 // pred_check_branch
          %1176 = sbr.rel (%p1174) target = $region76
        $region75: #{tpu_custom_call.1} parent=43 // pred_region
          %s1178 = ssub.s32 16, 16
          %1179 = vsyncadd %s1158, %s1178
          %s1180 = smul.addr %s34, 16
          %s1181 = scalar_lea.hbm %s7, %s1180
          %s1183 = sshll.u32 %s1160, 4
          %s1184 = int_to_ptr.vmem [resolvable:$true] %s1183
          %1186 = dma.vmem_to_hbm [thread:$0]  %s1184, 16, %s1181, %s1158
        $region76: #{tpu_custom_call.1} parent=43 // pred_fallthru
          _
      $region44: #{tpu_custom_call.1} parent=5 // pred_fallthru
        _
      %p1187 = scmp.le.s32.totalorder 2, %s25
      // Predicated region
      $region77: #{tpu_custom_call.1} parent=5 // pred_check
        %p1188 = pneg %p1187
      $region78: #{tpu_custom_call.1} parent=5 // pred_check_branch
        %1190 = sbr.rel (%p1188) target = $region80
      $region79: #{tpu_custom_call.1} parent=5 // pred_region
        %s1191 = ssub.s32 %s25, 2
        // Predicated region
        $region81: #{tpu_custom_call.1} parent=79 // pred_check
          %p1192 = pneg %p199
        $region82: #{tpu_custom_call.1} parent=79 // pred_check_branch
          %1194 = sbr.rel (%p1192) target = $region84
        $region83: #{tpu_custom_call.1} parent=79 // pred_region
          %s1195 = sand.u32 %s184, 1
          %s1196 = scalar_lea.sflag [#allocation6], %s1195
          %s1197 = sand.u32 %s184, 1
          %s1198 = scalar_lea.vmem [#allocation12], %s1197
          %1199 = dma.done %s1196, 16
        $region84: #{tpu_custom_call.1} parent=79 // pred_fallthru
          _
        // Predicated region
        $region85: #{tpu_custom_call.1} parent=79 // pred_check
          %p1200 = pneg %p225
        $region86: #{tpu_custom_call.1} parent=79 // pred_check_branch
          %1202 = sbr.rel (%p1200) target = $region88
        $region87: #{tpu_custom_call.1} parent=79 // pred_region
          %s1203 = sand.u32 %s210, 1
          %s1204 = scalar_lea.sflag [#allocation14], %s1203
          %s1205 = sand.u32 %s210, 1
          %s1206 = scalar_lea.vmem [#allocation13], %s1205
          %1207 = dma.done %s1204, 16
        $region88: #{tpu_custom_call.1} parent=79 // pred_fallthru
          _
      $region80: #{tpu_custom_call.1} parent=5 // pred_fallthru
        _
    $region6: #{tpu_custom_call.1} parent=1 // loop_footer
      %s29 = sadd.s32 1, %s25
    $region7: #{tpu_custom_call.1} parent=1 // loop_footer_branch
      %24 = sbr.rel target = $region3
    $region8: #{tpu_custom_call.1} parent=1 // loop_exit
      _
    %1208 = vsyncpa [#allocation5], 1
    %s1209 = scalar_lea.sflag [#allocation5], 1
    %1210 = vsyncpa %s1209, 1
    %1211 = vsyncpa [#allocation8], 1
    %1212 = vsyncpa [#allocation11], 1
    %1213 = vsyncpa [#allocation6], 1
    %s1214 = scalar_lea.sflag [#allocation6], 1
    %1215 = vsyncpa %s1214, 1
    %1216 = vsyncpa [#allocation14], 1
    %s1217 = scalar_lea.sflag [#allocation14], 1
    %1218 = vsyncpa %s1217, 1

</llo_original>
